<compile_context>
chip_gen: v5e
topology: v5e:2x2
jax: 0.10.0
libtpu: 0.0.40
codegen_flags: <defaults>
</compile_context>

<pallas_src>
import functools
import math

import numpy as np
import jax
import jax.numpy as jnp
from jax.experimental import pallas as pl
from jax.experimental.pallas import tpu as pltpu


# ---------------------------------------------------------------------------
# Host-side (numpy, float64) construction of the analytic basis "parameters".
# ---------------------------------------------------------------------------
def _spherical_jn_np(order, x):
    """Spherical Bessel j_order(x) via upward recursion (numpy, float64)."""
    x = np.asarray(x, dtype=np.float64)
    j_prev = np.sin(x) / x
    if order == 0:
        return j_prev
    j_cur = np.sin(x) / (x * x) - np.cos(x) / x
    for m in range(1, order):
        j_prev, j_cur = j_cur, (2.0 * m + 1.0) / x * j_cur - j_prev
    return j_cur


def _jn_zeros(n, k):
    """First k zeros of j_0 .. j_{n-1} (bisection on interlaced brackets)."""
    zerosj = np.zeros((n, k), dtype=np.float64)
    zerosj[0] = np.arange(1, k + 1) * np.pi
    points = np.arange(1, k + n) * np.pi
    racines = np.zeros(k + n - 1, dtype=np.float64)
    for i in range(1, n):
        for j in range(k + n - 1 - i):
            lo, hi = points[j], points[j + 1]
            flo = _spherical_jn_np(i, lo)
            for _ in range(80):
                mid = 0.5 * (lo + hi)
                fm = _spherical_jn_np(i, mid)
                if flo * fm <= 0.0:
                    hi = mid
                else:
                    lo, flo = mid, fm
            racines[j] = 0.5 * (lo + hi)
        points = racines.copy()
        zerosj[i, :k] = racines[:k]
    return zerosj


def _build_tables(num_spherical, num_radial):
    n, k = num_spherical, num_radial
    zeros = _jn_zeros(n, k)                                   # (n, k)
    norm = np.zeros((n, k), dtype=np.float64)
    for i in range(n):
        for j in range(k):
            norm[i, j] = 1.0 / np.sqrt(0.5 * _spherical_jn_np(i + 1, zeros[i, j]) ** 2)
    # Legendre polynomials P_l as coefficient arrays in cos(theta), ascending.
    P = [np.array([1.0])]
    if n > 1:
        P.append(np.array([0.0, 1.0]))
    for j in range(2, n):
        pj = ((2 * j - 1) * np.concatenate(([0.0], P[j - 1]))
              - (j - 1) * np.pad(P[j - 2], (0, 2))) / j
        P.append(pj)
    coef = np.zeros((n, n), dtype=np.float64)
    for i in range(n):
        coef[i, :len(P[i])] = math.sqrt((2 * i + 1) / (4.0 * math.pi)) * P[i]
    return (zeros.astype(np.float32), norm.astype(np.float32),
            coef.astype(np.float32))


# ---------------------------------------------------------------------------
# Pallas kernel (lane-dense in triplets)
# ---------------------------------------------------------------------------
def _sbl_kernel(dist_ref, angle_ref, zeros_ref, norm_ref, out_ref, *,
                num_spherical, num_radial, cutoff, p, coef):
    # layout: triplets on the lane (last) axis.
    #   dist_ref, angle_ref : (1, T_tile) f32
    #   zeros_ref, norm_ref : (num_radial, num_spherical) f32  (grid-invariant)
    #   out_ref             : (num_spherical*num_radial, T_tile) f32,
    #                         row i*num_radial + j == torch column order.
    k = num_radial
    x = dist_ref[...] * (1.0 / cutoff)             # (1, T)
    theta = angle_ref[...]                         # (1, T)

    # Envelope(p), Horner-factored, single reciprocal.
    a = -(p + 1) * (p + 2) / 2.0
    b = float(p * (p + 2))
    c = -p * (p + 1) / 2.0
    inv_x = 1.0 / x
    x_p = x ** p
    env = inv_x + x_p * (a + x * (b + c * x))
    env = jnp.where(x < 1.0, env, jnp.zeros_like(x))   # (1, T)

    cz = jnp.cos(theta)                            # (1, T)

    for i in range(num_spherical):
        # m = 0 real spherical harmonic: Horner eval of prefactor * P_i(cos th)
        if i == 0:
            cbf_i = jnp.full_like(cz, float(coef[0, 0]))
        else:
            cbf_i = float(coef[i, i])
            for m in range(i - 1, -1, -1):
                cbf_i = cbf_i * cz + float(coef[i, m])      # (1, T)

        # Radial basis: normalized spherical Bessel j_i(z[i, :] * x).
        z_col = zeros_ref[:, i:i + 1]                   # (k, 1)
        n_col = norm_ref[:, i:i + 1]                    # (k, 1)
        arg = z_col * x                                 # (k, T)
        inv_arg = 1.0 / arg                             # one divide per order
        sin_a = jnp.sin(arg)
        j0 = sin_a * inv_arg
        if i == 0:
            ji = j0
        else:
            cos_a = jnp.cos(arg)
            j_prev, j_cur = j0, (j0 - cos_a) * inv_arg  # j_1
            for m in range(1, i):
                j_prev, j_cur = j_cur, (2.0 * m + 1.0) * inv_arg * j_cur - j_prev
            ji = j_cur
        rbf_i = env * (n_col * ji)                      # (k, T)

        # Direct slab store (no in-kernel concatenate).
        out_ref[i * k:(i + 1) * k, :] = rbf_i * cbf_i


def spherical_basis_forward(dist, angle, idx_kj, *, num_spherical, num_radial,
                            cutoff=5.0, envelope_exponent=5, max_tile=512):
    zeros_np, norm_np, coef_np = _build_tables(num_spherical, num_radial)
    n, k = num_spherical, num_radial
    nk = n * k
    T = angle.shape[0]

    # rbf is elementwise in dist, so gather-then-compute == compute-then-gather
    dist_kj = jnp.take(dist.astype(jnp.float32), idx_kj, axis=0)

    # Lane-dense tile: multiple of 128, up to max_tile triplets per grid step.
    tile = min(max_tile, max(128, ((T + 127) // 128) * 128))
    T_pad = ((T + tile - 1) // tile) * tile
    pad = T_pad - T
    # pad dist with cutoff (x == 1 -> env == 0, no NaN), angle with 0.
    dist_kj = jnp.pad(dist_kj, (0, pad), constant_values=cutoff).reshape(1, T_pad)
    angle_p = jnp.pad(angle.astype(jnp.float32), (0, pad)).reshape(1, T_pad)

    # Tables as (k, n) inputs (columns of k on the sublane axis per order).
    zeros_t = jnp.asarray(zeros_np.T, dtype=jnp.float32)   # (k, n)
    norm_t = jnp.asarray(norm_np.T, dtype=jnp.float32)     # (k, n)

    kernel = functools.partial(_sbl_kernel, num_spherical=n, num_radial=k,
                               cutoff=float(cutoff), p=int(envelope_exponent),
                               coef=coef_np)
    out_t = pl.pallas_call(
        kernel,
        out_shape=jax.ShapeDtypeStruct((nk, T_pad), jnp.float32),
        grid=(T_pad // tile,),
        in_specs=[
            pl.BlockSpec((1, tile), lambda t: (0, t)),
            pl.BlockSpec((1, tile), lambda t: (0, t)),
            pl.BlockSpec((k, n), lambda t: (0, 0)),   # grid-invariant table
            pl.BlockSpec((k, n), lambda t: (0, 0)),   # grid-invariant table
        ],
        out_specs=pl.BlockSpec((nk, tile), lambda t: (0, t)),
        compiler_params=pltpu.CompilerParams(dimension_semantics=("parallel",)),
    )(dist_kj, angle_p, zeros_t, norm_t)
    # transpose back to (T, n*k) and drop padding
    return out_t.T[:T]


# ---------------------------------------------------------------------------
# Pure-JAX reference (same math, torch-style compute-then-gather ordering)
# ---------------------------------------------------------------------------
def _reference(dist, angle, idx_kj, *, num_spherical, num_radial, cutoff, p):
    zeros_np, norm_np, coef_np = _build_tables(num_spherical, num_radial)
    n, k = num_spherical, num_radial
    x = dist.astype(jnp.float32) / cutoff
    a = -(p + 1) * (p + 2) / 2.0
    b = float(p * (p + 2))
    c = -p * (p + 1) / 2.0
    env = jnp.where(x < 1.0,
                    1.0 / x + a * x**p + b * x**(p + 1) + c * x**(p + 2), 0.0)
    rbf_cols = []
    for i in range(n):
        arg = zeros_np[i][None, :] * x[:, None]
        sin_a = jnp.sin(arg)
        j_prev = sin_a / arg
        if i == 0:
            ji = j_prev
        else:
            j_cur = sin_a / (arg * arg) - jnp.cos(arg) / arg
            for m in range(1, i):
                j_prev, j_cur = j_cur, (2.0 * m + 1.0) / arg * j_cur - j_prev
            ji = j_cur
        rbf_cols.append(norm_np[i][None, :] * ji)
    rbf = jnp.concatenate(rbf_cols, axis=1) * env[:, None]
    cz = jnp.cos(angle.astype(jnp.float32))
    cbf = jnp.stack([jnp.polyval(jnp.asarray(coef_np[i][::-1].copy(), jnp.float32), cz)
                     for i in range(n)], axis=1)
    out = (rbf[idx_kj].reshape(-1, n, k) * cbf[:, :, None]).reshape(-1, n * k)
    return out


if __name__ == "__main__":
    num_spherical, num_radial = 7, 6
    cutoff, envelope_exponent = 5.0, 5
    E, T = 16, 20

    key = jax.random.PRNGKey(0)
    k1, k2, k3 = jax.random.split(key, 3)
    dist = jax.random.uniform(k1, (E,), jnp.float32, 1.0, cutoff)
    angle = jax.random.uniform(k2, (T,), jnp.float32, 0.0, math.pi)
    idx_kj = jax.random.randint(k3, (T,), 0, E, jnp.int32)

    out = spherical_basis_forward(
        dist, angle, idx_kj,
        num_spherical=num_spherical, num_radial=num_radial,
        cutoff=cutoff, envelope_exponent=envelope_exponent)
    out = jax.block_until_ready(out)
    assert out.shape == (T, num_spherical * num_radial)

    ref = _reference(dist, angle, idx_kj,
                     num_spherical=num_spherical, num_radial=num_radial,
                     cutoff=cutoff, p=envelope_exponent)
    np.testing.assert_allclose(np.asarray(out), np.asarray(ref),
                               rtol=1e-4, atol=1e-4)
    print("KERNEL_OK")
</pallas_src>

<mosaic_0001>
module attributes {stable_mosaic.version = 11 : i64} {
  func.func @_sbl_kernel(%arg0: i32, %arg1: memref<1x128xf32, #tpu.memory_space<vmem>>, %arg2: memref<1x128xf32, #tpu.memory_space<vmem>>, %arg3: memref<6x7xf32, #tpu.memory_space<vmem>>, %arg4: memref<6x7xf32, #tpu.memory_space<vmem>>, %arg5: memref<42x128xf32, #tpu.memory_space<vmem>>) attributes {dimension_semantics = [#tpu.dimension_semantics<parallel>], iteration_bounds = array<i64: 1>, scalar_prefetch = 0 : i64, scratch_operands = 0 : i64, tpu.core_type = #tpu.core_type<tc>, window_params = [{transform_indices = @transform_0, window_bounds = array<i64: 1, 128>}, {transform_indices = @transform_1, window_bounds = array<i64: 1, 128>}, {pipeline_mode = #tpu.pipeline_mode<synchronous>, transform_indices = @transform_2, window_bounds = array<i64: 6, 7>}, {pipeline_mode = #tpu.pipeline_mode<synchronous>, transform_indices = @transform_3, window_bounds = array<i64: 6, 7>}, {transform_indices = @transform_4, window_bounds = array<i64: 42, 128>}]} {
    %c0 = arith.constant 0 : index
    %c0_0 = arith.constant 0 : index
    %0 = vector.load %arg1[%c0, %c0_0] : memref<1x128xf32, #tpu.memory_space<vmem>>, vector<1x128xf32>
    %cst = arith.constant 2.000000e-01 : f32
    %1 = vector.broadcast %cst : f32 to vector<1x128xf32>
    %2 = arith.mulf %0, %1 : vector<1x128xf32>
    %c0_1 = arith.constant 0 : index
    %c0_2 = arith.constant 0 : index
    %3 = vector.load %arg2[%c0_1, %c0_2] : memref<1x128xf32, #tpu.memory_space<vmem>>, vector<1x128xf32>
    %cst_3 = arith.constant 1.000000e+00 : f32
    %4 = vector.broadcast %cst_3 : f32 to vector<1x128xf32>
    %5 = arith.divf %4, %2 : vector<1x128xf32>
    %6 = arith.mulf %2, %2 : vector<1x128xf32>
    %7 = arith.mulf %6, %6 : vector<1x128xf32>
    %8 = arith.mulf %2, %7 : vector<1x128xf32>
    %cst_4 = arith.constant -1.500000e+01 : f32
    %9 = vector.broadcast %cst_4 : f32 to vector<1x128xf32>
    %10 = arith.mulf %9, %2 : vector<1x128xf32>
    %cst_5 = arith.constant 3.500000e+01 : f32
    %11 = vector.broadcast %cst_5 : f32 to vector<1x128xf32>
    %12 = arith.addf %11, %10 : vector<1x128xf32>
    %13 = arith.mulf %2, %12 : vector<1x128xf32>
    %cst_6 = arith.constant -2.100000e+01 : f32
    %14 = vector.broadcast %cst_6 : f32 to vector<1x128xf32>
    %15 = arith.addf %14, %13 : vector<1x128xf32>
    %16 = arith.mulf %8, %15 : vector<1x128xf32>
    %17 = arith.addf %5, %16 : vector<1x128xf32>
    %cst_7 = arith.constant 1.000000e+00 : f32
    %18 = vector.broadcast %cst_7 : f32 to vector<1x128xf32>
    %19 = arith.cmpf olt, %2, %18 : vector<1x128xf32>
    %cst_8 = arith.constant 0.000000e+00 : f32
    %20 = vector.broadcast %cst_8 : f32 to vector<1x128xf32>
    %21 = arith.select %19, %17, %20 : vector<1x128xi1>, vector<1x128xf32>
    %22 = math.cos %3 : vector<1x128xf32>
    %cst_9 = arith.constant 0.282094806 : f32
    %23 = vector.broadcast %cst_9 : f32 to vector<1x128xf32>
    %c0_10 = arith.constant 0 : index
    %c0_11 = arith.constant 0 : index
    %24 = vector.load %arg3[%c0_10, %c0_11] : memref<6x7xf32, #tpu.memory_space<vmem>>, vector<6x1xf32>
    %c0_12 = arith.constant 0 : index
    %c0_13 = arith.constant 0 : index
    %25 = vector.load %arg4[%c0_12, %c0_13] : memref<6x7xf32, #tpu.memory_space<vmem>>, vector<6x1xf32>
    %26 = vector.broadcast %24 : vector<6x1xf32> to vector<6x128xf32>
    %27 = vector.broadcast %2 : vector<1x128xf32> to vector<6x128xf32>
    %28 = arith.mulf %26, %27 : vector<6x128xf32>
    %cst_14 = arith.constant 1.000000e+00 : f32
    %29 = vector.broadcast %cst_14 : f32 to vector<6x128xf32>
    %30 = arith.divf %29, %28 : vector<6x128xf32>
    %31 = math.sin %28 : vector<6x128xf32>
    %32 = arith.mulf %31, %30 : vector<6x128xf32>
    %33 = vector.broadcast %25 : vector<6x1xf32> to vector<6x128xf32>
    %34 = arith.mulf %33, %32 : vector<6x128xf32>
    %35 = vector.broadcast %21 : vector<1x128xf32> to vector<6x128xf32>
    %36 = arith.mulf %35, %34 : vector<6x128xf32>
    %37 = vector.broadcast %23 : vector<1x128xf32> to vector<6x128xf32>
    %38 = arith.mulf %36, %37 : vector<6x128xf32>
    %c0_15 = arith.constant 0 : index
    %c0_16 = arith.constant 0 : index
    %39 = vector.load %arg5[%c0_15, %c0_16] : memref<42x128xf32, #tpu.memory_space<vmem>>, vector<6x128xf32>
    tpu.vector_store %arg5[%c0_15, %c0_16], %38 {strides = array<i32>} : memref<42x128xf32, #tpu.memory_space<vmem>>, vector<6x128xf32>,
    %cst_17 = arith.constant 0.488602519 : f32
    %40 = vector.broadcast %cst_17 : f32 to vector<1x128xf32>
    %41 = arith.mulf %40, %22 : vector<1x128xf32>
    %cst_18 = arith.constant 0.000000e+00 : f32
    %42 = vector.broadcast %cst_18 : f32 to vector<1x128xf32>
    %43 = arith.addf %41, %42 : vector<1x128xf32>
    %c0_19 = arith.constant 0 : index
    %c1 = arith.constant 1 : index
    %44 = vector.load %arg3[%c0_19, %c1] : memref<6x7xf32, #tpu.memory_space<vmem>>, vector<6x1xf32>
    %c0_20 = arith.constant 0 : index
    %c1_21 = arith.constant 1 : index
    %45 = vector.load %arg4[%c0_20, %c1_21] : memref<6x7xf32, #tpu.memory_space<vmem>>, vector<6x1xf32>
    %46 = vector.broadcast %44 : vector<6x1xf32> to vector<6x128xf32>
    %47 = vector.broadcast %2 : vector<1x128xf32> to vector<6x128xf32>
    %48 = arith.mulf %46, %47 : vector<6x128xf32>
    %cst_22 = arith.constant 1.000000e+00 : f32
    %49 = vector.broadcast %cst_22 : f32 to vector<6x128xf32>
    %50 = arith.divf %49, %48 : vector<6x128xf32>
    %51 = math.sin %48 : vector<6x128xf32>
    %52 = arith.mulf %51, %50 : vector<6x128xf32>
    %53 = math.cos %48 : vector<6x128xf32>
    %54 = arith.subf %52, %53 : vector<6x128xf32>
    %55 = arith.mulf %54, %50 : vector<6x128xf32>
    %56 = vector.broadcast %45 : vector<6x1xf32> to vector<6x128xf32>
    %57 = arith.mulf %56, %55 : vector<6x128xf32>
    %58 = vector.broadcast %21 : vector<1x128xf32> to vector<6x128xf32>
    %59 = arith.mulf %58, %57 : vector<6x128xf32>
    %60 = vector.broadcast %43 : vector<1x128xf32> to vector<6x128xf32>
    %61 = arith.mulf %59, %60 : vector<6x128xf32>
    %c6 = arith.constant 6 : index
    %c0_23 = arith.constant 0 : index
    %62 = vector.load %arg5[%c6, %c0_23] : memref<42x128xf32, #tpu.memory_space<vmem>>, vector<6x128xf32>
    tpu.vector_store %arg5[%c6, %c0_23], %61 {strides = array<i32>} : memref<42x128xf32, #tpu.memory_space<vmem>>, vector<6x128xf32>,
    %cst_24 = arith.constant 0.946174681 : f32
    %63 = vector.broadcast %cst_24 : f32 to vector<1x128xf32>
    %64 = arith.mulf %63, %22 : vector<1x128xf32>
    %cst_25 = arith.constant 0.000000e+00 : f32
    %65 = vector.broadcast %cst_25 : f32 to vector<1x128xf32>
    %66 = arith.addf %64, %65 : vector<1x128xf32>
    %67 = arith.mulf %66, %22 : vector<1x128xf32>
    %cst_26 = arith.constant -0.31539157 : f32
    %68 = vector.broadcast %cst_26 : f32 to vector<1x128xf32>
    %69 = arith.addf %67, %68 : vector<1x128xf32>
    %c0_27 = arith.constant 0 : index
    %c2 = arith.constant 2 : index
    %70 = vector.load %arg3[%c0_27, %c2] : memref<6x7xf32, #tpu.memory_space<vmem>>, vector<6x1xf32>
    %c0_28 = arith.constant 0 : index
    %c2_29 = arith.constant 2 : index
    %71 = vector.load %arg4[%c0_28, %c2_29] : memref<6x7xf32, #tpu.memory_space<vmem>>, vector<6x1xf32>
    %72 = vector.broadcast %70 : vector<6x1xf32> to vector<6x128xf32>
    %73 = vector.broadcast %2 : vector<1x128xf32> to vector<6x128xf32>
    %74 = arith.mulf %72, %73 : vector<6x128xf32>
    %cst_30 = arith.constant 1.000000e+00 : f32
    %75 = vector.broadcast %cst_30 : f32 to vector<6x128xf32>
    %76 = arith.divf %75, %74 : vector<6x128xf32>
    %77 = math.sin %74 : vector<6x128xf32>
    %78 = arith.mulf %77, %76 : vector<6x128xf32>
    %79 = math.cos %74 : vector<6x128xf32>
    %80 = arith.subf %78, %79 : vector<6x128xf32>
    %81 = arith.mulf %80, %76 : vector<6x128xf32>
    %cst_31 = arith.constant 3.000000e+00 : f32
    %82 = vector.broadcast %cst_31 : f32 to vector<6x128xf32>
    %83 = arith.mulf %82, %76 : vector<6x128xf32>
    %84 = arith.mulf %83, %81 : vector<6x128xf32>
    %85 = arith.subf %84, %78 : vector<6x128xf32>
    %86 = vector.broadcast %71 : vector<6x1xf32> to vector<6x128xf32>
    %87 = arith.mulf %86, %85 : vector<6x128xf32>
    %88 = vector.broadcast %21 : vector<1x128xf32> to vector<6x128xf32>
    %89 = arith.mulf %88, %87 : vector<6x128xf32>
    %90 = vector.broadcast %69 : vector<1x128xf32> to vector<6x128xf32>
    %91 = arith.mulf %89, %90 : vector<6x128xf32>
    %c12 = arith.constant 12 : index
    %c0_32 = arith.constant 0 : index
    %92 = vector.load %arg5[%c12, %c0_32] : memref<42x128xf32, #tpu.memory_space<vmem>>, vector<6x128xf32>
    tpu.vector_store %arg5[%c12, %c0_32], %91 {strides = array<i32>} : memref<42x128xf32, #tpu.memory_space<vmem>>, vector<6x128xf32>,
    %cst_33 = arith.constant 1.86588168 : f32
    %93 = vector.broadcast %cst_33 : f32 to vector<1x128xf32>
    %94 = arith.mulf %93, %22 : vector<1x128xf32>
    %cst_34 = arith.constant 0.000000e+00 : f32
    %95 = vector.broadcast %cst_34 : f32 to vector<1x128xf32>
    %96 = arith.addf %94, %95 : vector<1x128xf32>
    %97 = arith.mulf %96, %22 : vector<1x128xf32>
    %cst_35 = arith.constant -1.11952901 : f32
    %98 = vector.broadcast %cst_35 : f32 to vector<1x128xf32>
    %99 = arith.addf %97, %98 : vector<1x128xf32>
    %100 = arith.mulf %99, %22 : vector<1x128xf32>
    %cst_36 = arith.constant 0.000000e+00 : f32
    %101 = vector.broadcast %cst_36 : f32 to vector<1x128xf32>
    %102 = arith.addf %100, %101 : vector<1x128xf32>
    %c0_37 = arith.constant 0 : index
    %c3 = arith.constant 3 : index
    %103 = vector.load %arg3[%c0_37, %c3] : memref<6x7xf32, #tpu.memory_space<vmem>>, vector<6x1xf32>
    %c0_38 = arith.constant 0 : index
    %c3_39 = arith.constant 3 : index
    %104 = vector.load %arg4[%c0_38, %c3_39] : memref<6x7xf32, #tpu.memory_space<vmem>>, vector<6x1xf32>
    %105 = vector.broadcast %103 : vector<6x1xf32> to vector<6x128xf32>
    %106 = vector.broadcast %2 : vector<1x128xf32> to vector<6x128xf32>
    %107 = arith.mulf %105, %106 : vector<6x128xf32>
    %cst_40 = arith.constant 1.000000e+00 : f32
    %108 = vector.broadcast %cst_40 : f32 to vector<6x128xf32>
    %109 = arith.divf %108, %107 : vector<6x128xf32>
    %110 = math.sin %107 : vector<6x128xf32>
    %111 = arith.mulf %110, %109 : vector<6x128xf32>
    %112 = math.cos %107 : vector<6x128xf32>
    %113 = arith.subf %111, %112 : vector<6x128xf32>
    %114 = arith.mulf %113, %109 : vector<6x128xf32>
    %cst_41 = arith.constant 3.000000e+00 : f32
    %115 = vector.broadcast %cst_41 : f32 to vector<6x128xf32>
    %116 = arith.mulf %115, %109 : vector<6x128xf32>
    %117 = arith.mulf %116, %114 : vector<6x128xf32>
    %118 = arith.subf %117, %111 : vector<6x128xf32>
    %cst_42 = arith.constant 5.000000e+00 : f32
    %119 = vector.broadcast %cst_42 : f32 to vector<6x128xf32>
    %120 = arith.mulf %119, %109 : vector<6x128xf32>
    %121 = arith.mulf %120, %118 : vector<6x128xf32>
    %122 = arith.subf %121, %114 : vector<6x128xf32>
    %123 = vector.broadcast %104 : vector<6x1xf32> to vector<6x128xf32>
    %124 = arith.mulf %123, %122 : vector<6x128xf32>
    %125 = vector.broadcast %21 : vector<1x128xf32> to vector<6x128xf32>
    %126 = arith.mulf %125, %124 : vector<6x128xf32>
    %127 = vector.broadcast %102 : vector<1x128xf32> to vector<6x128xf32>
    %128 = arith.mulf %126, %127 : vector<6x128xf32>
    %c18 = arith.constant 18 : index
    %c0_43 = arith.constant 0 : index
    %129 = vector.load %arg5[%c18, %c0_43] : memref<42x128xf32, #tpu.memory_space<vmem>>, vector<6x128xf32>
    tpu.vector_store %arg5[%c18, %c0_43], %128 {strides = array<i32>} : memref<42x128xf32, #tpu.memory_space<vmem>>, vector<6x128xf32>,
    %cst_44 = arith.constant 3.70249414 : f32
    %130 = vector.broadcast %cst_44 : f32 to vector<1x128xf32>
    %131 = arith.mulf %130, %22 : vector<1x128xf32>
    %cst_45 = arith.constant 0.000000e+00 : f32
    %132 = vector.broadcast %cst_45 : f32 to vector<1x128xf32>
    %133 = arith.addf %131, %132 : vector<1x128xf32>
    %134 = arith.mulf %133, %22 : vector<1x128xf32>
    %cst_46 = arith.constant -3.17356634 : f32
    %135 = vector.broadcast %cst_46 : f32 to vector<1x128xf32>
    %136 = arith.addf %134, %135 : vector<1x128xf32>
    %137 = arith.mulf %136, %22 : vector<1x128xf32>
    %cst_47 = arith.constant 0.000000e+00 : f32
    %138 = vector.broadcast %cst_47 : f32 to vector<1x128xf32>
    %139 = arith.addf %137, %138 : vector<1x128xf32>
    %140 = arith.mulf %139, %22 : vector<1x128xf32>
    %cst_48 = arith.constant 0.317356646 : f32
    %141 = vector.broadcast %cst_48 : f32 to vector<1x128xf32>
    %142 = arith.addf %140, %141 : vector<1x128xf32>
    %c0_49 = arith.constant 0 : index
    %c4 = arith.constant 4 : index
    %143 = vector.load %arg3[%c0_49, %c4] : memref<6x7xf32, #tpu.memory_space<vmem>>, vector<6x1xf32>
    %c0_50 = arith.constant 0 : index
    %c4_51 = arith.constant 4 : index
    %144 = vector.load %arg4[%c0_50, %c4_51] : memref<6x7xf32, #tpu.memory_space<vmem>>, vector<6x1xf32>
    %145 = vector.broadcast %143 : vector<6x1xf32> to vector<6x128xf32>
    %146 = vector.broadcast %2 : vector<1x128xf32> to vector<6x128xf32>
    %147 = arith.mulf %145, %146 : vector<6x128xf32>
    %cst_52 = arith.constant 1.000000e+00 : f32
    %148 = vector.broadcast %cst_52 : f32 to vector<6x128xf32>
    %149 = arith.divf %148, %147 : vector<6x128xf32>
    %150 = math.sin %147 : vector<6x128xf32>
    %151 = arith.mulf %150, %149 : vector<6x128xf32>
    %152 = math.cos %147 : vector<6x128xf32>
    %153 = arith.subf %151, %152 : vector<6x128xf32>
    %154 = arith.mulf %153, %149 : vector<6x128xf32>
    %cst_53 = arith.constant 3.000000e+00 : f32
    %155 = vector.broadcast %cst_53 : f32 to vector<6x128xf32>
    %156 = arith.mulf %155, %149 : vector<6x128xf32>
    %157 = arith.mulf %156, %154 : vector<6x128xf32>
    %158 = arith.subf %157, %151 : vector<6x128xf32>
    %cst_54 = arith.constant 5.000000e+00 : f32
    %159 = vector.broadcast %cst_54 : f32 to vector<6x128xf32>
    %160 = arith.mulf %159, %149 : vector<6x128xf32>
    %161 = arith.mulf %160, %158 : vector<6x128xf32>
    %162 = arith.subf %161, %154 : vector<6x128xf32>
    %cst_55 = arith.constant 7.000000e+00 : f32
    %163 = vector.broadcast %cst_55 : f32 to vector<6x128xf32>
    %164 = arith.mulf %163, %149 : vector<6x128xf32>
    %165 = arith.mulf %164, %162 : vector<6x128xf32>
    %166 = arith.subf %165, %158 : vector<6x128xf32>
    %167 = vector.broadcast %144 : vector<6x1xf32> to vector<6x128xf32>
    %168 = arith.mulf %167, %166 : vector<6x128xf32>
    %169 = vector.broadcast %21 : vector<1x128xf32> to vector<6x128xf32>
    %170 = arith.mulf %169, %168 : vector<6x128xf32>
    %171 = vector.broadcast %142 : vector<1x128xf32> to vector<6x128xf32>
    %172 = arith.mulf %170, %171 : vector<6x128xf32>
    %c24 = arith.constant 24 : index
    %c0_56 = arith.constant 0 : index
    %173 = vector.load %arg5[%c24, %c0_56] : memref<42x128xf32, #tpu.memory_space<vmem>>, vector<6x128xf32>
    tpu.vector_store %arg5[%c24, %c0_56], %172 {strides = array<i32>} : memref<42x128xf32, #tpu.memory_space<vmem>>, vector<6x128xf32>,
    %cst_57 = arith.constant 7.36787033 : f32
    %174 = vector.broadcast %cst_57 : f32 to vector<1x128xf32>
    %175 = arith.mulf %174, %22 : vector<1x128xf32>
    %cst_58 = arith.constant 0.000000e+00 : f32
    %176 = vector.broadcast %cst_58 : f32 to vector<1x128xf32>
    %177 = arith.addf %175, %176 : vector<1x128xf32>
    %178 = arith.mulf %177, %22 : vector<1x128xf32>
    %cst_59 = arith.constant -8.18652248 : f32
    %179 = vector.broadcast %cst_59 : f32 to vector<1x128xf32>
    %180 = arith.addf %178, %179 : vector<1x128xf32>
    %181 = arith.mulf %180, %22 : vector<1x128xf32>
    %cst_60 = arith.constant 0.000000e+00 : f32
    %182 = vector.broadcast %cst_60 : f32 to vector<1x128xf32>
    %183 = arith.addf %181, %182 : vector<1x128xf32>
    %184 = arith.mulf %183, %22 : vector<1x128xf32>
    %cst_61 = arith.constant 1.75425482 : f32
    %185 = vector.broadcast %cst_61 : f32 to vector<1x128xf32>
    %186 = arith.addf %184, %185 : vector<1x128xf32>
    %187 = arith.mulf %186, %22 : vector<1x128xf32>
    %cst_62 = arith.constant 0.000000e+00 : f32
    %188 = vector.broadcast %cst_62 : f32 to vector<1x128xf32>
    %189 = arith.addf %187, %188 : vector<1x128xf32>
    %c0_63 = arith.constant 0 : index
    %c5 = arith.constant 5 : index
    %190 = vector.load %arg3[%c0_63, %c5] : memref<6x7xf32, #tpu.memory_space<vmem>>, vector<6x1xf32>
    %c0_64 = arith.constant 0 : index
    %c5_65 = arith.constant 5 : index
    %191 = vector.load %arg4[%c0_64, %c5_65] : memref<6x7xf32, #tpu.memory_space<vmem>>, vector<6x1xf32>
    %192 = vector.broadcast %190 : vector<6x1xf32> to vector<6x128xf32>
    %193 = vector.broadcast %2 : vector<1x128xf32> to vector<6x128xf32>
    %194 = arith.mulf %192, %193 : vector<6x128xf32>
    %cst_66 = arith.constant 1.000000e+00 : f32
    %195 = vector.broadcast %cst_66 : f32 to vector<6x128xf32>
    %196 = arith.divf %195, %194 : vector<6x128xf32>
    %197 = math.sin %194 : vector<6x128xf32>
    %198 = arith.mulf %197, %196 : vector<6x128xf32>
    %199 = math.cos %194 : vector<6x128xf32>
    %200 = arith.subf %198, %199 : vector<6x128xf32>
    %201 = arith.mulf %200, %196 : vector<6x128xf32>
    %cst_67 = arith.constant 3.000000e+00 : f32
    %202 = vector.broadcast %cst_67 : f32 to vector<6x128xf32>
    %203 = arith.mulf %202, %196 : vector<6x128xf32>
    %204 = arith.mulf %203, %201 : vector<6x128xf32>
    %205 = arith.subf %204, %198 : vector<6x128xf32>
    %cst_68 = arith.constant 5.000000e+00 : f32
    %206 = vector.broadcast %cst_68 : f32 to vector<6x128xf32>
    %207 = arith.mulf %206, %196 : vector<6x128xf32>
    %208 = arith.mulf %207, %205 : vector<6x128xf32>
    %209 = arith.subf %208, %201 : vector<6x128xf32>
    %cst_69 = arith.constant 7.000000e+00 : f32
    %210 = vector.broadcast %cst_69 : f32 to vector<6x128xf32>
    %211 = arith.mulf %210, %196 : vector<6x128xf32>
    %212 = arith.mulf %211, %209 : vector<6x128xf32>
    %213 = arith.subf %212, %205 : vector<6x128xf32>
    %cst_70 = arith.constant 9.000000e+00 : f32
    %214 = vector.broadcast %cst_70 : f32 to vector<6x128xf32>
    %215 = arith.mulf %214, %196 : vector<6x128xf32>
    %216 = arith.mulf %215, %213 : vector<6x128xf32>
    %217 = arith.subf %216, %209 : vector<6x128xf32>
    %218 = vector.broadcast %191 : vector<6x1xf32> to vector<6x128xf32>
    %219 = arith.mulf %218, %217 : vector<6x128xf32>
    %220 = vector.broadcast %21 : vector<1x128xf32> to vector<6x128xf32>
    %221 = arith.mulf %220, %219 : vector<6x128xf32>
    %222 = vector.broadcast %189 : vector<1x128xf32> to vector<6x128xf32>
    %223 = arith.mulf %221, %222 : vector<6x128xf32>
    %c30 = arith.constant 30 : index
    %c0_71 = arith.constant 0 : index
    %224 = vector.load %arg5[%c30, %c0_71] : memref<42x128xf32, #tpu.memory_space<vmem>>, vector<6x128xf32>
    tpu.vector_store %arg5[%c30, %c0_71], %223 {strides = array<i32>} : memref<42x128xf32, #tpu.memory_space<vmem>>, vector<6x128xf32>,
    %cst_72 = arith.constant 14.6844854 : f32
    %225 = vector.broadcast %cst_72 : f32 to vector<1x128xf32>
    %226 = arith.mulf %225, %22 : vector<1x128xf32>
    %cst_73 = arith.constant 0.000000e+00 : f32
    %227 = vector.broadcast %cst_73 : f32 to vector<1x128xf32>
    %228 = arith.addf %226, %227 : vector<1x128xf32>
    %229 = arith.mulf %228, %22 : vector<1x128xf32>
    %cst_74 = arith.constant -2.002430e+01 : f32
    %230 = vector.broadcast %cst_74 : f32 to vector<1x128xf32>
    %231 = arith.addf %229, %230 : vector<1x128xf32>
    %232 = arith.mulf %231, %22 : vector<1x128xf32>
    %cst_75 = arith.constant 0.000000e+00 : f32
    %233 = vector.broadcast %cst_75 : f32 to vector<1x128xf32>
    %234 = arith.addf %232, %233 : vector<1x128xf32>
    %235 = arith.mulf %234, %22 : vector<1x128xf32>
    %cst_76 = arith.constant 6.67476606 : f32
    %236 = vector.broadcast %cst_76 : f32 to vector<1x128xf32>
    %237 = arith.addf %235, %236 : vector<1x128xf32>
    %238 = arith.mulf %237, %22 : vector<1x128xf32>
    %cst_77 = arith.constant 0.000000e+00 : f32
    %239 = vector.broadcast %cst_77 : f32 to vector<1x128xf32>
    %240 = arith.addf %238, %239 : vector<1x128xf32>
    %241 = arith.mulf %240, %22 : vector<1x128xf32>
    %cst_78 = arith.constant -3.178460e-01 : f32
    %242 = vector.broadcast %cst_78 : f32 to vector<1x128xf32>
    %243 = arith.addf %241, %242 : vector<1x128xf32>
    %c0_79 = arith.constant 0 : index
    %c6_80 = arith.constant 6 : index
    %244 = vector.load %arg3[%c0_79, %c6_80] : memref<6x7xf32, #tpu.memory_space<vmem>>, vector<6x1xf32>
    %c0_81 = arith.constant 0 : index
    %c6_82 = arith.constant 6 : index
    %245 = vector.load %arg4[%c0_81, %c6_82] : memref<6x7xf32, #tpu.memory_space<vmem>>, vector<6x1xf32>
    %246 = vector.broadcast %244 : vector<6x1xf32> to vector<6x128xf32>
    %247 = vector.broadcast %2 : vector<1x128xf32> to vector<6x128xf32>
    %248 = arith.mulf %246, %247 : vector<6x128xf32>
    %cst_83 = arith.constant 1.000000e+00 : f32
    %249 = vector.broadcast %cst_83 : f32 to vector<6x128xf32>
    %250 = arith.divf %249, %248 : vector<6x128xf32>
    %251 = math.sin %248 : vector<6x128xf32>
    %252 = arith.mulf %251, %250 : vector<6x128xf32>
    %253 = math.cos %248 : vector<6x128xf32>
    %254 = arith.subf %252, %253 : vector<6x128xf32>
    %255 = arith.mulf %254, %250 : vector<6x128xf32>
    %cst_84 = arith.constant 3.000000e+00 : f32
    %256 = vector.broadcast %cst_84 : f32 to vector<6x128xf32>
    %257 = arith.mulf %256, %250 : vector<6x128xf32>
    %258 = arith.mulf %257, %255 : vector<6x128xf32>
    %259 = arith.subf %258, %252 : vector<6x128xf32>
    %cst_85 = arith.constant 5.000000e+00 : f32
    %260 = vector.broadcast %cst_85 : f32 to vector<6x128xf32>
    %261 = arith.mulf %260, %250 : vector<6x128xf32>
    %262 = arith.mulf %261, %259 : vector<6x128xf32>
    %263 = arith.subf %262, %255 : vector<6x128xf32>
    %cst_86 = arith.constant 7.000000e+00 : f32
    %264 = vector.broadcast %cst_86 : f32 to vector<6x128xf32>
    %265 = arith.mulf %264, %250 : vector<6x128xf32>
    %266 = arith.mulf %265, %263 : vector<6x128xf32>
    %267 = arith.subf %266, %259 : vector<6x128xf32>
    %cst_87 = arith.constant 9.000000e+00 : f32
    %268 = vector.broadcast %cst_87 : f32 to vector<6x128xf32>
    %269 = arith.mulf %268, %250 : vector<6x128xf32>
    %270 = arith.mulf %269, %267 : vector<6x128xf32>
    %271 = arith.subf %270, %263 : vector<6x128xf32>
    %cst_88 = arith.constant 1.100000e+01 : f32
    %272 = vector.broadcast %cst_88 : f32 to vector<6x128xf32>
    %273 = arith.mulf %272, %250 : vector<6x128xf32>
    %274 = arith.mulf %273, %271 : vector<6x128xf32>
    %275 = arith.subf %274, %267 : vector<6x128xf32>
    %276 = vector.broadcast %245 : vector<6x1xf32> to vector<6x128xf32>
    %277 = arith.mulf %276, %275 : vector<6x128xf32>
    %278 = vector.broadcast %21 : vector<1x128xf32> to vector<6x128xf32>
    %279 = arith.mulf %278, %277 : vector<6x128xf32>
    %280 = vector.broadcast %243 : vector<1x128xf32> to vector<6x128xf32>
    %281 = arith.mulf %279, %280 : vector<6x128xf32>
    %c36 = arith.constant 36 : index
    %c0_89 = arith.constant 0 : index
    %282 = vector.load %arg5[%c36, %c0_89] : memref<42x128xf32, #tpu.memory_space<vmem>>, vector<6x128xf32>
    tpu.vector_store %arg5[%c36, %c0_89], %281 {strides = array<i32>} : memref<42x128xf32, #tpu.memory_space<vmem>>, vector<6x128xf32>,
    return
  }
  func.func @transform_0(%arg0: i32) -> (i32, i32) {
    %c0_i32 = arith.constant 0 : i32
    %c0_i32_0 = arith.constant 0 : i32
    return %c0_i32, %arg0 : i32, i32
  }
  func.func @transform_1(%arg0: i32) -> (i32, i32) {
    %c0_i32 = arith.constant 0 : i32
    %c0_i32_0 = arith.constant 0 : i32
    return %c0_i32, %arg0 : i32, i32
  }
  func.func @transform_2(%arg0: i32) -> (i32, i32) {
    %c0_i32 = arith.constant 0 : i32
    %c0_i32_0 = arith.constant 0 : i32
    %c0_i32_1 = arith.constant 0 : i32
    return %c0_i32, %c0_i32_0 : i32, i32
  }
  func.func @transform_3(%arg0: i32) -> (i32, i32) {
    %c0_i32 = arith.constant 0 : i32
    %c0_i32_0 = arith.constant 0 : i32
    %c0_i32_1 = arith.constant 0 : i32
    return %c0_i32, %c0_i32_0 : i32, i32
  }
  func.func @transform_4(%arg0: i32) -> (i32, i32) {
    %c0_i32 = arith.constant 0 : i32
    %c0_i32_0 = arith.constant 0 : i32
    return %c0_i32, %arg0 : i32, i32
  }
}

</mosaic_0001>

<llo_original>
// kernel: tpu_custom_call.1
$region0: #{tpu_custom_call.1}
  #allocation0 [shape = 'u32[]', space=smem, size = 0x4, offset = 0x4, fixed_abs, tag = 'smem constant byte address 0x4 - core index']
  #allocation1 [shape = 'u32[72,128]{1,0:T(1,128)}', space=vmem, size = 0x9000, scoped, tag = 'internal scratch']
  %s0 = inlined_call_operand.hbm [shape: f32[1,128], index: 0, kind: input, shape index: {}]
  %s1 = inlined_call_operand.hbm [shape: f32[1,128], index: 1, kind: input, shape index: {}]
  %s2 = inlined_call_operand.hbm [shape: f32[6,7], index: 2, kind: input, shape index: {}]
  %s3 = inlined_call_operand.hbm [shape: f32[6,7], index: 3, kind: input, shape index: {}]
  %s4 = inlined_call_operand.hbm [shape: f32[42,128], index: 4, kind: output, shape index: {}]
  %s5 = sld [smem:[#allocation0]]
  $region42: #{tpu_custom_call.1} parent=0
    _
  %s7 = ssub.s32 1, %s5
  %s8 = scalar_select 0, %s7, %s5
  $region1: #{tpu_custom_call.1} parent=0
    #allocation2 [shape = 'u8[512]{0}', space=vmem, size = 0x400, scoped, tag = 'input window, operand 0, single buffered']
    #allocation3 [shape = 's32[1]{0}', space=sflag, size = 0x4, scoped, tag = 'scoped memory for tpu_custom_call.1']
    #allocation4 [shape = 's32[1]{0}', space=sflag, size = 0x4, scoped, tag = 'scoped memory for tpu_custom_call.1']
    #allocation5 [shape = 'u8[512]{0}', space=vmem, size = 0x400, scoped, tag = 'input window, operand 1, single buffered']
    #allocation6 [shape = 's32[1]{0}', space=sflag, size = 0x4, scoped, tag = 'scoped memory for tpu_custom_call.1']
    #allocation7 [shape = 'u8[4096]{0}', space=vmem, size = 0x1000, scoped, tag = 'input window, operand 2, single buffered']
    #allocation8 [shape = 'u8[4096]{0}', space=vmem, size = 0x1000, scoped, tag = 'input window, operand 3, single buffered']
    #allocation9 [shape = 's32[1]{0}', space=sflag, size = 0x4, scoped, tag = 'scoped memory for tpu_custom_call.1']
    #allocation10 [shape = 'u8[24576]{0}', space=vmem, size = 0x6000, scoped, tag = 'output window, operand 0, single buffered']
    %9 = vsyncpa [#allocation3], 0
    %10 = vsyncpa [#allocation6], 0
    %11 = vsyncpa [#allocation9], 0
    %12 = vsyncpa [#allocation4], 0
    // Predicated region
    $region2: #{tpu_custom_call.1} parent=1 // pred_check
      _
    $region3: #{tpu_custom_call.1} parent=1 // pred_check_branch
      %14 = sbr.rel (0) target = $region5
    $region4: #{tpu_custom_call.1} parent=1 // pred_region
      %16 = vsyncadd [#allocation3], 0
      %s18 = sshll.u32 %s0, 4
      %s19 = int_to_ptr.hbm [resolvable:$true] %s18
      %s20 = sshll.u32 [#allocation2], 4
      %s21 = int_to_ptr.vmem [resolvable:$true] %s20
      %23 = dma.hbm_to_vmem [thread:$0]  %s19, 16, %s21, [#allocation3]
    $region5: #{tpu_custom_call.1} parent=1 // pred_fallthru
      _
    // Predicated region
    $region6: #{tpu_custom_call.1} parent=1 // pred_check
      _
    $region7: #{tpu_custom_call.1} parent=1 // pred_check_branch
      %25 = sbr.rel (0) target = $region9
    $region8: #{tpu_custom_call.1} parent=1 // pred_region
      %27 = vsyncadd [#allocation6], 0
      %s29 = sshll.u32 %s1, 4
      %s30 = int_to_ptr.hbm [resolvable:$true] %s29
      %s31 = sshll.u32 [#allocation5], 4
      %s32 = int_to_ptr.vmem [resolvable:$true] %s31
      %34 = dma.hbm_to_vmem [thread:$0]  %s30, 16, %s32, [#allocation6]
    $region9: #{tpu_custom_call.1} parent=1 // pred_fallthru
      _
    // Predicated region
    $region10: #{tpu_custom_call.1} parent=1 // pred_check
      _
    $region11: #{tpu_custom_call.1} parent=1 // pred_check_branch
      %36 = sbr.rel (0) target = $region13
    $region12: #{tpu_custom_call.1} parent=1 // pred_region
      %38 = vsyncadd [#allocation6], 0
      %s40 = sshll.u32 %s2, 4
      %s41 = int_to_ptr.hbm [resolvable:$true] %s40
      %s42 = sshll.u32 [#allocation7], 4
      %s43 = int_to_ptr.vmem [resolvable:$true] %s42
      %45 = dma.hbm_to_vmem [thread:$0]  %s41, 128, %s43, [#allocation6]
    $region13: #{tpu_custom_call.1} parent=1 // pred_fallthru
      _
    // Predicated region
    $region14: #{tpu_custom_call.1} parent=1 // pred_check
      _
    $region15: #{tpu_custom_call.1} parent=1 // pred_check_branch
      %47 = sbr.rel (0) target = $region17
    $region16: #{tpu_custom_call.1} parent=1 // pred_region
      %49 = vsyncadd [#allocation9], 0
      %s51 = sshll.u32 %s3, 4
      %s52 = int_to_ptr.hbm [resolvable:$true] %s51
      %s53 = sshll.u32 [#allocation8], 4
      %s54 = int_to_ptr.vmem [resolvable:$true] %s53
      %56 = dma.hbm_to_vmem [thread:$0]  %s52, 128, %s54, [#allocation9]
    $region17: #{tpu_custom_call.1} parent=1 // pred_fallthru
      _
    // Predicated region
    $region18: #{tpu_custom_call.1} parent=1 // pred_check
      _
    $region19: #{tpu_custom_call.1} parent=1 // pred_check_branch
      %58 = sbr.rel (0) target = $region21
    $region20: #{tpu_custom_call.1} parent=1 // pred_region
      %60 = dma.done [#allocation3], 16
    $region21: #{tpu_custom_call.1} parent=1 // pred_fallthru
      _
    // Predicated region
    $region22: #{tpu_custom_call.1} parent=1 // pred_check
      _
    $region23: #{tpu_custom_call.1} parent=1 // pred_check_branch
      %62 = sbr.rel (0) target = $region25
    $region24: #{tpu_custom_call.1} parent=1 // pred_region
      %64 = dma.done [#allocation6], 16
    $region25: #{tpu_custom_call.1} parent=1 // pred_fallthru
      _
    // Predicated region
    $region26: #{tpu_custom_call.1} parent=1 // pred_check
      _
    $region27: #{tpu_custom_call.1} parent=1 // pred_check_branch
      %66 = sbr.rel (0) target = $region29
    $region28: #{tpu_custom_call.1} parent=1 // pred_region
      %68 = dma.done [#allocation6], 128
    $region29: #{tpu_custom_call.1} parent=1 // pred_fallthru
      _
    // Predicated region
    $region30: #{tpu_custom_call.1} parent=1 // pred_check
      _
    $region31: #{tpu_custom_call.1} parent=1 // pred_check_branch
      %70 = sbr.rel (0) target = $region33
    $region32: #{tpu_custom_call.1} parent=1 // pred_region
      %72 = dma.done [#allocation9], 128
    $region33: #{tpu_custom_call.1} parent=1 // pred_fallthru
      _
    %v73 = vld [vmem:[#allocation2] sm:$0x1]
    %v74 = vmul.f32 %v73, 0.2
    %v75 = vld [vmem:[#allocation5] sm:$0x1]
    %v76 = vrcp.pop %v74
    %v77 = vmul.f32 %v74, %v76
    %v78 = vsub.f32 1.0, %v77
    %v79 = vmul.f32 %v76, %v78
    %v80 = vadd.f32 %v76, %v79
    %vm81 = vweird.f32 %v74
    %vm82 = vweird.f32 %v76
    %vm83 = vmor %vm81, %vm82
    %v84 = vsel %vm83, %v76, %v80
    %v85 = vand.u32 2147483647, %v74
    %vm86 = vcmp.eq.f32.partialorder %v85, 8.507059e+37
    %v87 = vand.u32 %v74, 2147483648
    %v88 = vor.u32 1.1754944e-38, %v87
    %v89 = vsel %vm86, %v88, %v84
    %v90 = vmul.f32 1.0, %v89
    %v91 = vmul.f32 %v74, %v74
    %v92 = vmul.f32 %v91, %v91
    %v93 = vmul.f32 %v74, %v92
    %v94 = vmul.f32 %v74, -15.0
    %v95 = vadd.f32 %v94, 35.0
    %v96 = vmul.f32 %v74, %v95
    %v97 = vadd.f32 %v96, -21.0
    %v98 = vmul.f32 %v93, %v97
    %v99 = vadd.f32 %v90, %v98
    %vm100 = vcmp.lt.f32.partialorder %v74, 1.0
    %v101 = vsel %vm100, %v99, 0.0
    %v102 = vand.u32 2147483647, %v75
    %vm103 = vcmp.le.f32.partialorder %v102, 0.7853982
    %vm104 = vcmp.lt.s32.totalorder %v75, 0
    %v105 = vand.u32 %v75, 2139095040
    %v106 = vshrl.u32 %v105, 23
    %v107 = vsub.s32 %v106, 127
    %v108 = vand.u32 2147483647, %v75
    %v109 = vand.u32 %v108, 8388607
    %v110 = vor.u32 %v109, 8388608
    %v111 = vsub.s32 0, %v110
    %v112 = vadd.s32 %v107, 1
    %vm113 = vcmp.gt.s32.totalorder %v112, 0
    %v114 = vsel %vm113, %v112, 0
    %v115 = vshrl.u32 %v114, 5
    %v116 = vand.u32 %v114, 31
    %v117 = vsub.s32 32, %v116
    %v118 = vshrl.u32 683565275, %v117
    %v119 = vshll.u32 683565275, %v116
    %v120 = vshrl.u32 2475754826, %v117
    %v121 = vor.u32 %v119, %v120
    %v122 = vshll.u32 2475754826, %v116
    %v123 = vshrl.u32 2131351028, %v117
    %v124 = vor.u32 %v122, %v123
    %v125 = vshll.u32 2131351028, %v116
    %v126 = vshrl.u32 2102212464, %v117
    %v127 = vor.u32 %v125, %v126
    %v128 = vshll.u32 2102212464, %v116
    %v129 = vshrl.u32 920167782, %v117
    %v130 = vor.u32 %v128, %v129
    %v131 = vshll.u32 920167782, %v116
    %v132 = vshrl.u32 1326507024, %v117
    %v133 = vor.u32 %v131, %v132
    %vm134 = vcmp.lt.s32.totalorder %v115, 1
    %vm135 = vcmp.lt.s32.totalorder %v115, 2
    %vm136 = vcmp.lt.s32.totalorder %v115, 3
    %vm137 = vcmp.lt.s32.totalorder %v115, 4
    %v138 = vsel %vm134, %v118, %v121
    %v139 = vsel %vm137, %v127, 2102212464
    %v140 = vsel %vm136, %v124, %v139
    %v141 = vsel %vm135, %v138, %v140
    %v142 = vsel %vm134, %v121, %v124
    %v143 = vsel %vm137, %v130, 920167782
    %v144 = vsel %vm136, %v127, %v143
    %v145 = vsel %vm135, %v142, %v144
    %v146 = vsel %vm134, %v124, %v127
    %v147 = vsel %vm137, %v133, 1326507024
    %v148 = vsel %vm136, %v130, %v147
    %v149 = vsel %vm135, %v146, %v148
    %v150 = vshll.u32 %v110, 8
    %v151 = vand.u32 %v150, 65535
    %v152 = vshrl.u32 %v150, 16
    %v153 = vand.u32 %v149, 65535
    %v154 = vshrl.u32 %v149, 16
    %v155 = vmul.u32 %v151, %v153
    %v156 = vmul.u32 %v151, %v154
    %v157 = vmul.u32 %v152, %v153
    %v158 = vmul.u32 %v152, %v154
    %v159 = vshll.u32 %v156, 16
    %v160 = vshrl.u32 %v156, 16
    %v161 = vshll.u32 %v157, 16
    %v162 = vshrl.u32 %v157, 16
    %vm163 = vc.u32 %v155, %v159
    %v164 = vsel %vm163, 1, 0
    %v165 = vadd.s32 %v155, %v159
    %v166 = vadd.s32 %v158, %v164
    %vm167 = vc.u32 %v165, %v161
    %v168 = vsel %vm167, 1, 0
    %v169 = vadd.s32 %v165, %v161
    %v170 = vadd.s32 %v166, %v168
    %v171 = vadd.s32 %v170, %v160
    %v172 = vadd.s32 %v171, %v162
    %v173 = vand.u32 %v150, 65535
    %v174 = vshrl.u32 %v150, 16
    %v175 = vand.u32 %v145, 65535
    %v176 = vshrl.u32 %v145, 16
    %v177 = vmul.u32 %v173, %v175
    %v178 = vmul.u32 %v173, %v176
    %v179 = vmul.u32 %v174, %v175
    %v180 = vmul.u32 %v174, %v176
    %v181 = vshll.u32 %v178, 16
    %v182 = vshrl.u32 %v178, 16
    %v183 = vshll.u32 %v179, 16
    %v184 = vshrl.u32 %v179, 16
    %vm185 = vc.u32 %v177, %v181
    %v186 = vsel %vm185, 1, 0
    %v187 = vadd.s32 %v177, %v181
    %v188 = vadd.s32 %v180, %v186
    %vm189 = vc.u32 %v187, %v183
    %v190 = vsel %vm189, 1, 0
    %v191 = vadd.s32 %v187, %v183
    %v192 = vadd.s32 %v188, %v190
    %v193 = vadd.s32 %v192, %v182
    %v194 = vadd.s32 %v193, %v184
    %v195 = vmul.u32 %v150, %v141
    %v196 = vadd.s32 %v172, %v191
    %vm197 = vc.u32 %v172, %v191
    %v198 = vadd.s32 %v194, 1
    %v199 = vsel %vm197, %v198, %v194
    %v200 = vadd.s32 %v195, %v199
    %v201 = vadd.s32 %v200, 536870912
    %v202 = vshrl.u32 %v201, 30
    %v203 = vshll.u32 %v202, 30
    %v204 = vsub.s32 %v200, %v203
    %vm205 = vcmp.lt.s32.totalorder %v204, 0
    %v206 = vsub.s32 0, %v204
    %v207 = vsel %vm205, %v206, %v204
    %v208 = vclz %v207
    %v209 = vsub.s32 %v208, 2
    %vm210 = vcmp.gt.s32.totalorder 0, %v209
    %v211 = vsel %vm210, 0, %v209
    %v212 = vsub.s32 32, %v211
    %v213 = vshll.u32 %v204, %v211
    %v214 = vshrl.u32 %v196, %v212
    %v215 = vor.u32 %v213, %v214
    %v216 = vsub.s32 4294967266, %v211
    %v217 = vadd.s32 %v216, 127
    %v218 = vshll.u32 %v217, 23
    %v219 = vor.u32 4788187, %v218
    %v220 = vand.u32 2147483647, %v219
    %v222 = vcvt.s32.f32 %v215
    %v223 = vmul.f32 %v222, %v220
    %v224 = vxor.u32 %v223, 2147483648
    %v225 = vsel %vm104, %v224, %v223
    %v226 = vsub.s32 4, %v202
    %v227 = vsel %vm104, %v226, %v202
    %v228 = vsel %vm103, %v75, %v225
    %v229 = vsel %vm103, 0, %v227
    %v230 = vmul.f32 %v228, %v228
    %v231 = vmul.f32 %v230, -0.001358992
    %v232 = vadd.f32 %v231, 0.041655596
    %v233 = vmul.f32 %v230, %v232
    %v234 = vadd.f32 %v233, -0.4999988
    %v235 = vmul.f32 %v230, %v234
    %v236 = vadd.f32 1.0, %v235
    %v237 = vmul.f32 %v228, %v228
    %v238 = vmul.f32 %v237, -0.00019511016
    %v239 = vadd.f32 %v238, 0.008332121
    %v240 = vmul.f32 %v237, %v239
    %v241 = vadd.f32 %v240, -0.16666654
    %v242 = vmul.f32 %v237, %v241
    %v243 = vadd.f32 %v242, 1.0
    %v244 = vmul.f32 %v243, %v228
    %vm245 = vweird.f32 %v75
    %v246 = vand.u32 %v229, 3
    %vm247 = vcmp.lt.s32.totalorder %v246, 2
    %vm248 = vcmp.eq.s32.totalorder %v246, 0
    %v249 = vxor.u32 %v244, 2147483648
    %v250 = vsel %vm248, %v236, %v249
    %vm251 = vcmp.eq.s32.totalorder %v246, 2
    %v252 = vxor.u32 %v236, 2147483648
    %v253 = vsel %vm251, %v252, %v244
    %v254 = vsel %vm247, %v250, %v253
    %v255 = vsel %vm245, nan, %v254
    %v256 = vld [vmem:[#allocation7] sm:$0x3f]
    %v257 = vld [vmem:[#allocation8] sm:$0x3f]
    %259 = vset.pattern.permute.xlu0 0
    %260 = vperm.xlu0 %259, %v256
    %v261 = vpop.permute.xlu0 %260
    %v264 = vperm.slane %v74, 0
    %v266 = vmul.f32 %v261, %v264
    %v267 = vrcp.pop %v266
    %v268 = vmul.f32 %v266, %v267
    %v269 = vsub.f32 1.0, %v268
    %v270 = vmul.f32 %v267, %v269
    %v271 = vadd.f32 %v267, %v270
    %vm272 = vweird.f32 %v266
    %vm273 = vweird.f32 %v267
    %vm274 = vmor %vm272, %vm273
    %v275 = vsel %vm274, %v267, %v271
    %v276 = vand.u32 2147483647, %v266
    %vm277 = vcmp.eq.f32.partialorder %v276, 8.507059e+37
    %v278 = vand.u32 %v266, 2147483648
    %v279 = vor.u32 1.1754944e-38, %v278
    %v280 = vsel %vm277, %v279, %v275
    %v281 = vmul.f32 1.0, %v280
    %v282 = vand.u32 2147483647, %v266
    %vm283 = vcmp.le.f32.partialorder %v282, 0.7853982
    %vm284 = vcmp.lt.s32.totalorder %v266, 0
    %v285 = vand.u32 %v266, 2139095040
    %v286 = vshrl.u32 %v285, 23
    %v287 = vsub.s32 %v286, 127
    %v288 = vand.u32 2147483647, %v266
    %v289 = vand.u32 %v288, 8388607
    %v290 = vor.u32 %v289, 8388608
    %v291 = vsub.s32 0, %v290
    %v292 = vadd.s32 %v287, 1
    %vm293 = vcmp.gt.s32.totalorder %v292, 0
    %v294 = vsel %vm293, %v292, 0
    %v295 = vshrl.u32 %v294, 5
    %v296 = vand.u32 %v294, 31
    %v297 = vsub.s32 32, %v296
    %v298 = vshrl.u32 683565275, %v297
    %v299 = vshll.u32 683565275, %v296
    %v300 = vshrl.u32 2475754826, %v297
    %v301 = vor.u32 %v299, %v300
    %v302 = vshll.u32 2475754826, %v296
    %v303 = vshrl.u32 2131351028, %v297
    %v304 = vor.u32 %v302, %v303
    %v305 = vshll.u32 2131351028, %v296
    %v306 = vshrl.u32 2102212464, %v297
    %v307 = vor.u32 %v305, %v306
    %v308 = vshll.u32 2102212464, %v296
    %v309 = vshrl.u32 920167782, %v297
    %v310 = vor.u32 %v308, %v309
    %v311 = vshll.u32 920167782, %v296
    %v312 = vshrl.u32 1326507024, %v297
    %v313 = vor.u32 %v311, %v312
    %vm314 = vcmp.lt.s32.totalorder %v295, 1
    %vm315 = vcmp.lt.s32.totalorder %v295, 2
    %vm316 = vcmp.lt.s32.totalorder %v295, 3
    %vm317 = vcmp.lt.s32.totalorder %v295, 4
    %v318 = vsel %vm314, %v298, %v301
    %v319 = vsel %vm317, %v307, 2102212464
    %v320 = vsel %vm316, %v304, %v319
    %v321 = vsel %vm315, %v318, %v320
    %v322 = vsel %vm314, %v301, %v304
    %v323 = vsel %vm317, %v310, 920167782
    %v324 = vsel %vm316, %v307, %v323
    %v325 = vsel %vm315, %v322, %v324
    %v326 = vsel %vm314, %v304, %v307
    %v327 = vsel %vm317, %v313, 1326507024
    %v328 = vsel %vm316, %v310, %v327
    %v329 = vsel %vm315, %v326, %v328
    %v330 = vshll.u32 %v290, 8
    %v331 = vand.u32 %v330, 65535
    %v332 = vshrl.u32 %v330, 16
    %v333 = vand.u32 %v329, 65535
    %v334 = vshrl.u32 %v329, 16
    %v335 = vmul.u32 %v331, %v333
    %v336 = vmul.u32 %v331, %v334
    %v337 = vmul.u32 %v332, %v333
    %v338 = vmul.u32 %v332, %v334
    %v339 = vshll.u32 %v336, 16
    %v340 = vshrl.u32 %v336, 16
    %v341 = vshll.u32 %v337, 16
    %v342 = vshrl.u32 %v337, 16
    %vm343 = vc.u32 %v335, %v339
    %v344 = vsel %vm343, 1, 0
    %v345 = vadd.s32 %v335, %v339
    %v346 = vadd.s32 %v338, %v344
    %vm347 = vc.u32 %v345, %v341
    %v348 = vsel %vm347, 1, 0
    %v349 = vadd.s32 %v345, %v341
    %v350 = vadd.s32 %v346, %v348
    %v351 = vadd.s32 %v350, %v340
    %v352 = vadd.s32 %v351, %v342
    %v353 = vand.u32 %v330, 65535
    %v354 = vshrl.u32 %v330, 16
    %v355 = vand.u32 %v325, 65535
    %v356 = vshrl.u32 %v325, 16
    %v357 = vmul.u32 %v353, %v355
    %v358 = vmul.u32 %v353, %v356
    %v359 = vmul.u32 %v354, %v355
    %v360 = vmul.u32 %v354, %v356
    %v361 = vshll.u32 %v358, 16
    %v362 = vshrl.u32 %v358, 16
    %v363 = vshll.u32 %v359, 16
    %v364 = vshrl.u32 %v359, 16
    %vm365 = vc.u32 %v357, %v361
    %v366 = vsel %vm365, 1, 0
    %v367 = vadd.s32 %v357, %v361
    %v368 = vadd.s32 %v360, %v366
    %vm369 = vc.u32 %v367, %v363
    %v370 = vsel %vm369, 1, 0
    %v371 = vadd.s32 %v367, %v363
    %v372 = vadd.s32 %v368, %v370
    %v373 = vadd.s32 %v372, %v362
    %v374 = vadd.s32 %v373, %v364
    %v375 = vmul.u32 %v330, %v321
    %v376 = vadd.s32 %v352, %v371
    %vm377 = vc.u32 %v352, %v371
    %v378 = vadd.s32 %v374, 1
    %v379 = vsel %vm377, %v378, %v374
    %v380 = vadd.s32 %v375, %v379
    %v381 = vadd.s32 %v380, 536870912
    %v382 = vshrl.u32 %v381, 30
    %v383 = vshll.u32 %v382, 30
    %v384 = vsub.s32 %v380, %v383
    %vm385 = vcmp.lt.s32.totalorder %v384, 0
    %v386 = vsub.s32 0, %v384
    %v387 = vsel %vm385, %v386, %v384
    %v388 = vclz %v387
    %v389 = vsub.s32 %v388, 2
    %vm390 = vcmp.gt.s32.totalorder 0, %v389
    %v391 = vsel %vm390, 0, %v389
    %v392 = vsub.s32 32, %v391
    %v393 = vshll.u32 %v384, %v391
    %v394 = vshrl.u32 %v376, %v392
    %v395 = vor.u32 %v393, %v394
    %v396 = vsub.s32 4294967266, %v391
    %v397 = vadd.s32 %v396, 127
    %v398 = vshll.u32 %v397, 23
    %v399 = vor.u32 4788187, %v398
    %v400 = vand.u32 2147483647, %v399
    %v402 = vcvt.s32.f32 %v395
    %v403 = vmul.f32 %v402, %v400
    %v404 = vxor.u32 %v403, 2147483648
    %v405 = vsel %vm284, %v404, %v403
    %v406 = vsub.s32 4, %v382
    %v407 = vsel %vm284, %v406, %v382
    %v408 = vsel %vm283, %v266, %v405
    %v409 = vsel %vm283, 0, %v407
    %v410 = vmul.f32 %v408, %v408
    %v411 = vmul.f32 %v410, -0.001358992
    %v412 = vadd.f32 %v411, 0.041655596
    %v413 = vmul.f32 %v410, %v412
    %v414 = vadd.f32 %v413, -0.4999988
    %v415 = vmul.f32 %v410, %v414
    %v416 = vadd.f32 1.0, %v415
    %v417 = vmul.f32 %v408, %v408
    %v418 = vmul.f32 %v417, -0.00019511016
    %v419 = vadd.f32 %v418, 0.008332121
    %v420 = vmul.f32 %v417, %v419
    %v421 = vadd.f32 %v420, -0.16666654
    %v422 = vmul.f32 %v417, %v421
    %v423 = vadd.f32 %v422, 1.0
    %v424 = vmul.f32 %v423, %v408
    %vm425 = vweird.f32 %v266
    %v426 = vadd.s32 %v409, 3
    %v427 = vand.u32 %v426, 3
    %vm428 = vcmp.lt.s32.totalorder %v427, 2
    %vm429 = vcmp.eq.s32.totalorder %v427, 0
    %v430 = vxor.u32 %v424, 2147483648
    %v431 = vsel %vm429, %v416, %v430
    %vm432 = vcmp.eq.s32.totalorder %v427, 2
    %v433 = vxor.u32 %v416, 2147483648
    %v434 = vsel %vm432, %v433, %v424
    %v435 = vsel %vm428, %v431, %v434
    %v436 = vsel %vm425, nan, %v435
    %v437 = vmul.f32 %v436, %v281
    %439 = vset.pattern.permute.xlu0 0
    %440 = vperm.xlu0 %439, %v257
    %v441 = vpop.permute.xlu0 %440
    %v443 = vmul.f32 %v441, %v437
    %v445 = vperm.slane %v101, 0
    %v447 = vmul.f32 %v445, %v443
    %v448 = vmul.f32 %v447, 0.2820948
    %449 = vst [vmem:[#allocation10] sm:$0x3f] %v448
    %v450 = vmul.f32 %v255, 0.48860252
    %v451 = vadd.f32 %v450, 0.0
    %v452 = vld [vmem:[#allocation7] sm:$0x3f]
    %v453 = vld [vmem:[#allocation8] sm:$0x3f]
    %455 = vset.pattern.permute.xlu0 1
    %456 = vperm.xlu0 %455, %v452
    %v457 = vpop.permute.xlu0 %456
    %v459 = vmul.f32 %v457, %v264
    %v460 = vrcp.pop %v459
    %v461 = vmul.f32 %v459, %v460
    %v462 = vsub.f32 1.0, %v461
    %v463 = vmul.f32 %v460, %v462
    %v464 = vadd.f32 %v460, %v463
    %vm465 = vweird.f32 %v459
    %vm466 = vweird.f32 %v460
    %vm467 = vmor %vm465, %vm466
    %v468 = vsel %vm467, %v460, %v464
    %v469 = vand.u32 2147483647, %v459
    %vm470 = vcmp.eq.f32.partialorder %v469, 8.507059e+37
    %v471 = vand.u32 %v459, 2147483648
    %v472 = vor.u32 1.1754944e-38, %v471
    %v473 = vsel %vm470, %v472, %v468
    %v474 = vmul.f32 1.0, %v473
    %v475 = vand.u32 2147483647, %v459
    %vm476 = vcmp.le.f32.partialorder %v475, 0.7853982
    %vm477 = vcmp.lt.s32.totalorder %v459, 0
    %v478 = vand.u32 %v459, 2139095040
    %v479 = vshrl.u32 %v478, 23
    %v480 = vsub.s32 %v479, 127
    %v481 = vand.u32 2147483647, %v459
    %v482 = vand.u32 %v481, 8388607
    %v483 = vor.u32 %v482, 8388608
    %v484 = vsub.s32 0, %v483
    %v485 = vadd.s32 %v480, 1
    %vm486 = vcmp.gt.s32.totalorder %v485, 0
    %v487 = vsel %vm486, %v485, 0
    %v488 = vshrl.u32 %v487, 5
    %v489 = vand.u32 %v487, 31
    %v490 = vsub.s32 32, %v489
    %v491 = vshrl.u32 683565275, %v490
    %v492 = vshll.u32 683565275, %v489
    %v493 = vshrl.u32 2475754826, %v490
    %v494 = vor.u32 %v492, %v493
    %v495 = vshll.u32 2475754826, %v489
    %v496 = vshrl.u32 2131351028, %v490
    %v497 = vor.u32 %v495, %v496
    %v498 = vshll.u32 2131351028, %v489
    %v499 = vshrl.u32 2102212464, %v490
    %v500 = vor.u32 %v498, %v499
    %v501 = vshll.u32 2102212464, %v489
    %v502 = vshrl.u32 920167782, %v490
    %v503 = vor.u32 %v501, %v502
    %v504 = vshll.u32 920167782, %v489
    %v505 = vshrl.u32 1326507024, %v490
    %v506 = vor.u32 %v504, %v505
    %vm507 = vcmp.lt.s32.totalorder %v488, 1
    %vm508 = vcmp.lt.s32.totalorder %v488, 2
    %vm509 = vcmp.lt.s32.totalorder %v488, 3
    %vm510 = vcmp.lt.s32.totalorder %v488, 4
    %v511 = vsel %vm507, %v491, %v494
    %v512 = vsel %vm510, %v500, 2102212464
    %v513 = vsel %vm509, %v497, %v512
    %v514 = vsel %vm508, %v511, %v513
    %v515 = vsel %vm507, %v494, %v497
    %v516 = vsel %vm510, %v503, 920167782
    %v517 = vsel %vm509, %v500, %v516
    %v518 = vsel %vm508, %v515, %v517
    %v519 = vsel %vm507, %v497, %v500
    %v520 = vsel %vm510, %v506, 1326507024
    %v521 = vsel %vm509, %v503, %v520
    %v522 = vsel %vm508, %v519, %v521
    %v523 = vshll.u32 %v483, 8
    %v524 = vand.u32 %v523, 65535
    %v525 = vshrl.u32 %v523, 16
    %v526 = vand.u32 %v522, 65535
    %v527 = vshrl.u32 %v522, 16
    %v528 = vmul.u32 %v524, %v526
    %v529 = vmul.u32 %v524, %v527
    %v530 = vmul.u32 %v525, %v526
    %v531 = vmul.u32 %v525, %v527
    %v532 = vshll.u32 %v529, 16
    %v533 = vshrl.u32 %v529, 16
    %v534 = vshll.u32 %v530, 16
    %v535 = vshrl.u32 %v530, 16
    %vm536 = vc.u32 %v528, %v532
    %v537 = vsel %vm536, 1, 0
    %v538 = vadd.s32 %v528, %v532
    %v539 = vadd.s32 %v531, %v537
    %vm540 = vc.u32 %v538, %v534
    %v541 = vsel %vm540, 1, 0
    %v542 = vadd.s32 %v538, %v534
    %v543 = vadd.s32 %v539, %v541
    %v544 = vadd.s32 %v543, %v533
    %v545 = vadd.s32 %v544, %v535
    %v546 = vand.u32 %v523, 65535
    %v547 = vshrl.u32 %v523, 16
    %v548 = vand.u32 %v518, 65535
    %v549 = vshrl.u32 %v518, 16
    %v550 = vmul.u32 %v546, %v548
    %v551 = vmul.u32 %v546, %v549
    %v552 = vmul.u32 %v547, %v548
    %v553 = vmul.u32 %v547, %v549
    %v554 = vshll.u32 %v551, 16
    %v555 = vshrl.u32 %v551, 16
    %v556 = vshll.u32 %v552, 16
    %v557 = vshrl.u32 %v552, 16
    %vm558 = vc.u32 %v550, %v554
    %v559 = vsel %vm558, 1, 0
    %v560 = vadd.s32 %v550, %v554
    %v561 = vadd.s32 %v553, %v559
    %vm562 = vc.u32 %v560, %v556
    %v563 = vsel %vm562, 1, 0
    %v564 = vadd.s32 %v560, %v556
    %v565 = vadd.s32 %v561, %v563
    %v566 = vadd.s32 %v565, %v555
    %v567 = vadd.s32 %v566, %v557
    %v568 = vmul.u32 %v523, %v514
    %v569 = vadd.s32 %v545, %v564
    %vm570 = vc.u32 %v545, %v564
    %v571 = vadd.s32 %v567, 1
    %v572 = vsel %vm570, %v571, %v567
    %v573 = vadd.s32 %v568, %v572
    %v574 = vadd.s32 %v573, 536870912
    %v575 = vshrl.u32 %v574, 30
    %v576 = vshll.u32 %v575, 30
    %v577 = vsub.s32 %v573, %v576
    %vm578 = vcmp.lt.s32.totalorder %v577, 0
    %v579 = vsub.s32 0, %v577
    %v580 = vsel %vm578, %v579, %v577
    %v581 = vclz %v580
    %v582 = vsub.s32 %v581, 2
    %vm583 = vcmp.gt.s32.totalorder 0, %v582
    %v584 = vsel %vm583, 0, %v582
    %v585 = vsub.s32 32, %v584
    %v586 = vshll.u32 %v577, %v584
    %v587 = vshrl.u32 %v569, %v585
    %v588 = vor.u32 %v586, %v587
    %v589 = vsub.s32 4294967266, %v584
    %v590 = vadd.s32 %v589, 127
    %v591 = vshll.u32 %v590, 23
    %v592 = vor.u32 4788187, %v591
    %v593 = vand.u32 2147483647, %v592
    %v595 = vcvt.s32.f32 %v588
    %v596 = vmul.f32 %v595, %v593
    %v597 = vxor.u32 %v596, 2147483648
    %v598 = vsel %vm477, %v597, %v596
    %v599 = vsub.s32 4, %v575
    %v600 = vsel %vm477, %v599, %v575
    %v601 = vsel %vm476, %v459, %v598
    %v602 = vsel %vm476, 0, %v600
    %v603 = vmul.f32 %v601, %v601
    %v604 = vmul.f32 %v603, -0.001358992
    %v605 = vadd.f32 %v604, 0.041655596
    %v606 = vmul.f32 %v603, %v605
    %v607 = vadd.f32 %v606, -0.4999988
    %v608 = vmul.f32 %v603, %v607
    %v609 = vadd.f32 1.0, %v608
    %v610 = vmul.f32 %v601, %v601
    %v611 = vmul.f32 %v610, -0.00019511016
    %v612 = vadd.f32 %v611, 0.008332121
    %v613 = vmul.f32 %v610, %v612
    %v614 = vadd.f32 %v613, -0.16666654
    %v615 = vmul.f32 %v610, %v614
    %v616 = vadd.f32 %v615, 1.0
    %v617 = vmul.f32 %v616, %v601
    %vm618 = vweird.f32 %v459
    %v619 = vadd.s32 %v602, 3
    %v620 = vand.u32 %v619, 3
    %vm621 = vcmp.lt.s32.totalorder %v620, 2
    %vm622 = vcmp.eq.s32.totalorder %v620, 0
    %v623 = vxor.u32 %v617, 2147483648
    %v624 = vsel %vm622, %v609, %v623
    %vm625 = vcmp.eq.s32.totalorder %v620, 2
    %v626 = vxor.u32 %v609, 2147483648
    %v627 = vsel %vm625, %v626, %v617
    %v628 = vsel %vm621, %v624, %v627
    %v629 = vsel %vm618, nan, %v628
    %v630 = vmul.f32 %v629, %v474
    %v631 = vand.u32 2147483647, %v459
    %vm632 = vcmp.le.f32.partialorder %v631, 0.7853982
    %vm633 = vcmp.lt.s32.totalorder %v459, 0
    %v634 = vand.u32 %v459, 2139095040
    %v635 = vshrl.u32 %v634, 23
    %v636 = vsub.s32 %v635, 127
    %v637 = vand.u32 2147483647, %v459
    %v638 = vand.u32 %v637, 8388607
    %v639 = vor.u32 %v638, 8388608
    %v640 = vsub.s32 0, %v639
    %v641 = vadd.s32 %v636, 1
    %vm642 = vcmp.gt.s32.totalorder %v641, 0
    %v643 = vsel %vm642, %v641, 0
    %v644 = vshrl.u32 %v643, 5
    %v645 = vand.u32 %v643, 31
    %v646 = vsub.s32 32, %v645
    %v647 = vshrl.u32 683565275, %v646
    %v648 = vshll.u32 683565275, %v645
    %v649 = vshrl.u32 2475754826, %v646
    %v650 = vor.u32 %v648, %v649
    %v651 = vshll.u32 2475754826, %v645
    %v652 = vshrl.u32 2131351028, %v646
    %v653 = vor.u32 %v651, %v652
    %v654 = vshll.u32 2131351028, %v645
    %v655 = vshrl.u32 2102212464, %v646
    %v656 = vor.u32 %v654, %v655
    %v657 = vshll.u32 2102212464, %v645
    %v658 = vshrl.u32 920167782, %v646
    %v659 = vor.u32 %v657, %v658
    %v660 = vshll.u32 920167782, %v645
    %v661 = vshrl.u32 1326507024, %v646
    %v662 = vor.u32 %v660, %v661
    %vm663 = vcmp.lt.s32.totalorder %v644, 1
    %vm664 = vcmp.lt.s32.totalorder %v644, 2
    %vm665 = vcmp.lt.s32.totalorder %v644, 3
    %vm666 = vcmp.lt.s32.totalorder %v644, 4
    %v667 = vsel %vm663, %v647, %v650
    %v668 = vsel %vm666, %v656, 2102212464
    %v669 = vsel %vm665, %v653, %v668
    %v670 = vsel %vm664, %v667, %v669
    %v671 = vsel %vm663, %v650, %v653
    %v672 = vsel %vm666, %v659, 920167782
    %v673 = vsel %vm665, %v656, %v672
    %v674 = vsel %vm664, %v671, %v673
    %v675 = vsel %vm663, %v653, %v656
    %v676 = vsel %vm666, %v662, 1326507024
    %v677 = vsel %vm665, %v659, %v676
    %v678 = vsel %vm664, %v675, %v677
    %v679 = vshll.u32 %v639, 8
    %v680 = vand.u32 %v679, 65535
    %v681 = vshrl.u32 %v679, 16
    %v682 = vand.u32 %v678, 65535
    %v683 = vshrl.u32 %v678, 16
    %v684 = vmul.u32 %v680, %v682
    %v685 = vmul.u32 %v680, %v683
    %v686 = vmul.u32 %v681, %v682
    %v687 = vmul.u32 %v681, %v683
    %v688 = vshll.u32 %v685, 16
    %v689 = vshrl.u32 %v685, 16
    %v690 = vshll.u32 %v686, 16
    %v691 = vshrl.u32 %v686, 16
    %vm692 = vc.u32 %v684, %v688
    %v693 = vsel %vm692, 1, 0
    %v694 = vadd.s32 %v684, %v688
    %v695 = vadd.s32 %v687, %v693
    %vm696 = vc.u32 %v694, %v690
    %v697 = vsel %vm696, 1, 0
    %v698 = vadd.s32 %v694, %v690
    %v699 = vadd.s32 %v695, %v697
    %v700 = vadd.s32 %v699, %v689
    %v701 = vadd.s32 %v700, %v691
    %v702 = vand.u32 %v679, 65535
    %v703 = vshrl.u32 %v679, 16
    %v704 = vand.u32 %v674, 65535
    %v705 = vshrl.u32 %v674, 16
    %v706 = vmul.u32 %v702, %v704
    %v707 = vmul.u32 %v702, %v705
    %v708 = vmul.u32 %v703, %v704
    %v709 = vmul.u32 %v703, %v705
    %v710 = vshll.u32 %v707, 16
    %v711 = vshrl.u32 %v707, 16
    %v712 = vshll.u32 %v708, 16
    %v713 = vshrl.u32 %v708, 16
    %vm714 = vc.u32 %v706, %v710
    %v715 = vsel %vm714, 1, 0
    %v716 = vadd.s32 %v706, %v710
    %v717 = vadd.s32 %v709, %v715
    %vm718 = vc.u32 %v716, %v712
    %v719 = vsel %vm718, 1, 0
    %v720 = vadd.s32 %v716, %v712
    %v721 = vadd.s32 %v717, %v719
    %v722 = vadd.s32 %v721, %v711
    %v723 = vadd.s32 %v722, %v713
    %v724 = vmul.u32 %v679, %v670
    %v725 = vadd.s32 %v701, %v720
    %vm726 = vc.u32 %v701, %v720
    %v727 = vadd.s32 %v723, 1
    %v728 = vsel %vm726, %v727, %v723
    %v729 = vadd.s32 %v724, %v728
    %v730 = vadd.s32 %v729, 536870912
    %v731 = vshrl.u32 %v730, 30
    %v732 = vshll.u32 %v731, 30
    %v733 = vsub.s32 %v729, %v732
    %vm734 = vcmp.lt.s32.totalorder %v733, 0
    %v735 = vsub.s32 0, %v733
    %v736 = vsel %vm734, %v735, %v733
    %v737 = vclz %v736
    %v738 = vsub.s32 %v737, 2
    %vm739 = vcmp.gt.s32.totalorder 0, %v738
    %v740 = vsel %vm739, 0, %v738
    %v741 = vsub.s32 32, %v740
    %v742 = vshll.u32 %v733, %v740
    %v743 = vshrl.u32 %v725, %v741
    %v744 = vor.u32 %v742, %v743
    %v745 = vsub.s32 4294967266, %v740
    %v746 = vadd.s32 %v745, 127
    %v747 = vshll.u32 %v746, 23
    %v748 = vor.u32 4788187, %v747
    %v749 = vand.u32 2147483647, %v748
    %v751 = vcvt.s32.f32 %v744
    %v752 = vmul.f32 %v751, %v749
    %v753 = vxor.u32 %v752, 2147483648
    %v754 = vsel %vm633, %v753, %v752
    %v755 = vsub.s32 4, %v731
    %v756 = vsel %vm633, %v755, %v731
    %v757 = vsel %vm632, %v459, %v754
    %v758 = vsel %vm632, 0, %v756
    %v759 = vmul.f32 %v757, %v757
    %v760 = vmul.f32 %v759, -0.001358992
    %v761 = vadd.f32 %v760, 0.041655596
    %v762 = vmul.f32 %v759, %v761
    %v763 = vadd.f32 %v762, -0.4999988
    %v764 = vmul.f32 %v759, %v763
    %v765 = vadd.f32 1.0, %v764
    %v766 = vmul.f32 %v757, %v757
    %v767 = vmul.f32 %v766, -0.00019511016
    %v768 = vadd.f32 %v767, 0.008332121
    %v769 = vmul.f32 %v766, %v768
    %v770 = vadd.f32 %v769, -0.16666654
    %v771 = vmul.f32 %v766, %v770
    %v772 = vadd.f32 %v771, 1.0
    %v773 = vmul.f32 %v772, %v757
    %vm774 = vweird.f32 %v459
    %v775 = vand.u32 %v758, 3
    %vm776 = vcmp.lt.s32.totalorder %v775, 2
    %vm777 = vcmp.eq.s32.totalorder %v775, 0
    %v778 = vxor.u32 %v773, 2147483648
    %v779 = vsel %vm777, %v765, %v778
    %vm780 = vcmp.eq.s32.totalorder %v775, 2
    %v781 = vxor.u32 %v765, 2147483648
    %v782 = vsel %vm780, %v781, %v773
    %v783 = vsel %vm776, %v779, %v782
    %v784 = vsel %vm774, nan, %v783
    %v785 = vsub.f32 %v630, %v784
    %v786 = vmul.f32 %v785, %v474
    %788 = vset.pattern.permute.xlu0 1
    %789 = vperm.xlu0 %788, %v453
    %v790 = vpop.permute.xlu0 %789
    %v792 = vmul.f32 %v790, %v786
    %v793 = vmul.f32 %v445, %v792
    %v795 = vperm.slane %v451, 0
    %v797 = vmul.f32 %v793, %v795
    %798 = vst [vmem:[#allocation10 + $0x6] sm:$0x3f] %v797
    %v799 = vmul.f32 %v255, 0.9461747
    %v800 = vadd.f32 %v799, 0.0
    %v801 = vmul.f32 %v800, %v255
    %v802 = vadd.f32 %v801, -0.31539157
    %v803 = vld [vmem:[#allocation7] sm:$0x3f]
    %v804 = vld [vmem:[#allocation8] sm:$0x3f]
    %806 = vset.pattern.permute.xlu0 2
    %807 = vperm.xlu0 %806, %v803
    %v808 = vpop.permute.xlu0 %807
    %v810 = vmul.f32 %v808, %v264
    %v811 = vrcp.pop %v810
    %v812 = vmul.f32 %v810, %v811
    %v813 = vsub.f32 1.0, %v812
    %v814 = vmul.f32 %v811, %v813
    %v815 = vadd.f32 %v811, %v814
    %vm816 = vweird.f32 %v810
    %vm817 = vweird.f32 %v811
    %vm818 = vmor %vm816, %vm817
    %v819 = vsel %vm818, %v811, %v815
    %v820 = vand.u32 2147483647, %v810
    %vm821 = vcmp.eq.f32.partialorder %v820, 8.507059e+37
    %v822 = vand.u32 %v810, 2147483648
    %v823 = vor.u32 1.1754944e-38, %v822
    %v824 = vsel %vm821, %v823, %v819
    %v825 = vmul.f32 1.0, %v824
    %v826 = vand.u32 2147483647, %v810
    %vm827 = vcmp.le.f32.partialorder %v826, 0.7853982
    %vm828 = vcmp.lt.s32.totalorder %v810, 0
    %v829 = vand.u32 %v810, 2139095040
    %v830 = vshrl.u32 %v829, 23
    %v831 = vsub.s32 %v830, 127
    %v832 = vand.u32 2147483647, %v810
    %v833 = vand.u32 %v832, 8388607
    %v834 = vor.u32 %v833, 8388608
    %v835 = vsub.s32 0, %v834
    %v836 = vadd.s32 %v831, 1
    %vm837 = vcmp.gt.s32.totalorder %v836, 0
    %v838 = vsel %vm837, %v836, 0
    %v839 = vshrl.u32 %v838, 5
    %v840 = vand.u32 %v838, 31
    %v841 = vsub.s32 32, %v840
    %v842 = vshrl.u32 683565275, %v841
    %v843 = vshll.u32 683565275, %v840
    %v844 = vshrl.u32 2475754826, %v841
    %v845 = vor.u32 %v843, %v844
    %v846 = vshll.u32 2475754826, %v840
    %v847 = vshrl.u32 2131351028, %v841
    %v848 = vor.u32 %v846, %v847
    %v849 = vshll.u32 2131351028, %v840
    %v850 = vshrl.u32 2102212464, %v841
    %v851 = vor.u32 %v849, %v850
    %v852 = vshll.u32 2102212464, %v840
    %v853 = vshrl.u32 920167782, %v841
    %v854 = vor.u32 %v852, %v853
    %v855 = vshll.u32 920167782, %v840
    %v856 = vshrl.u32 1326507024, %v841
    %v857 = vor.u32 %v855, %v856
    %vm858 = vcmp.lt.s32.totalorder %v839, 1
    %vm859 = vcmp.lt.s32.totalorder %v839, 2
    %vm860 = vcmp.lt.s32.totalorder %v839, 3
    %vm861 = vcmp.lt.s32.totalorder %v839, 4
    %v862 = vsel %vm858, %v842, %v845
    %v863 = vsel %vm861, %v851, 2102212464
    %v864 = vsel %vm860, %v848, %v863
    %v865 = vsel %vm859, %v862, %v864
    %v866 = vsel %vm858, %v845, %v848
    %v867 = vsel %vm861, %v854, 920167782
    %v868 = vsel %vm860, %v851, %v867
    %v869 = vsel %vm859, %v866, %v868
    %v870 = vsel %vm858, %v848, %v851
    %v871 = vsel %vm861, %v857, 1326507024
    %v872 = vsel %vm860, %v854, %v871
    %v873 = vsel %vm859, %v870, %v872
    %v874 = vshll.u32 %v834, 8
    %v875 = vand.u32 %v874, 65535
    %v876 = vshrl.u32 %v874, 16
    %v877 = vand.u32 %v873, 65535
    %v878 = vshrl.u32 %v873, 16
    %v879 = vmul.u32 %v875, %v877
    %v880 = vmul.u32 %v875, %v878
    %v881 = vmul.u32 %v876, %v877
    %v882 = vmul.u32 %v876, %v878
    %v883 = vshll.u32 %v880, 16
    %v884 = vshrl.u32 %v880, 16
    %v885 = vshll.u32 %v881, 16
    %v886 = vshrl.u32 %v881, 16
    %vm887 = vc.u32 %v879, %v883
    %v888 = vsel %vm887, 1, 0
    %v889 = vadd.s32 %v879, %v883
    %v890 = vadd.s32 %v882, %v888
    %vm891 = vc.u32 %v889, %v885
    %v892 = vsel %vm891, 1, 0
    %v893 = vadd.s32 %v889, %v885
    %v894 = vadd.s32 %v890, %v892
    %v895 = vadd.s32 %v894, %v884
    %v896 = vadd.s32 %v895, %v886
    %v897 = vand.u32 %v874, 65535
    %v898 = vshrl.u32 %v874, 16
    %v899 = vand.u32 %v869, 65535
    %v900 = vshrl.u32 %v869, 16
    %v901 = vmul.u32 %v897, %v899
    %v902 = vmul.u32 %v897, %v900
    %v903 = vmul.u32 %v898, %v899
    %v904 = vmul.u32 %v898, %v900
    %v905 = vshll.u32 %v902, 16
    %v906 = vshrl.u32 %v902, 16
    %v907 = vshll.u32 %v903, 16
    %v908 = vshrl.u32 %v903, 16
    %vm909 = vc.u32 %v901, %v905
    %v910 = vsel %vm909, 1, 0
    %v911 = vadd.s32 %v901, %v905
    %v912 = vadd.s32 %v904, %v910
    %vm913 = vc.u32 %v911, %v907
    %v914 = vsel %vm913, 1, 0
    %v915 = vadd.s32 %v911, %v907
    %v916 = vadd.s32 %v912, %v914
    %v917 = vadd.s32 %v916, %v906
    %v918 = vadd.s32 %v917, %v908
    %v919 = vmul.u32 %v874, %v865
    %v920 = vadd.s32 %v896, %v915
    %vm921 = vc.u32 %v896, %v915
    %v922 = vadd.s32 %v918, 1
    %v923 = vsel %vm921, %v922, %v918
    %v924 = vadd.s32 %v919, %v923
    %v925 = vadd.s32 %v924, 536870912
    %v926 = vshrl.u32 %v925, 30
    %v927 = vshll.u32 %v926, 30
    %v928 = vsub.s32 %v924, %v927
    %vm929 = vcmp.lt.s32.totalorder %v928, 0
    %v930 = vsub.s32 0, %v928
    %v931 = vsel %vm929, %v930, %v928
    %v932 = vclz %v931
    %v933 = vsub.s32 %v932, 2
    %vm934 = vcmp.gt.s32.totalorder 0, %v933
    %v935 = vsel %vm934, 0, %v933
    %v936 = vsub.s32 32, %v935
    %v937 = vshll.u32 %v928, %v935
    %v938 = vshrl.u32 %v920, %v936
    %v939 = vor.u32 %v937, %v938
    %v940 = vsub.s32 4294967266, %v935
    %v941 = vadd.s32 %v940, 127
    %v942 = vshll.u32 %v941, 23
    %v943 = vor.u32 4788187, %v942
    %v944 = vand.u32 2147483647, %v943
    %v946 = vcvt.s32.f32 %v939
    %v947 = vmul.f32 %v946, %v944
    %v948 = vxor.u32 %v947, 2147483648
    %v949 = vsel %vm828, %v948, %v947
    %v950 = vsub.s32 4, %v926
    %v951 = vsel %vm828, %v950, %v926
    %v952 = vsel %vm827, %v810, %v949
    %v953 = vsel %vm827, 0, %v951
    %v954 = vmul.f32 %v952, %v952
    %v955 = vmul.f32 %v954, -0.001358992
    %v956 = vadd.f32 %v955, 0.041655596
    %v957 = vmul.f32 %v954, %v956
    %v958 = vadd.f32 %v957, -0.4999988
    %v959 = vmul.f32 %v954, %v958
    %v960 = vadd.f32 1.0, %v959
    %v961 = vmul.f32 %v952, %v952
    %v962 = vmul.f32 %v961, -0.00019511016
    %v963 = vadd.f32 %v962, 0.008332121
    %v964 = vmul.f32 %v961, %v963
    %v965 = vadd.f32 %v964, -0.16666654
    %v966 = vmul.f32 %v961, %v965
    %v967 = vadd.f32 %v966, 1.0
    %v968 = vmul.f32 %v967, %v952
    %vm969 = vweird.f32 %v810
    %v970 = vadd.s32 %v953, 3
    %v971 = vand.u32 %v970, 3
    %vm972 = vcmp.lt.s32.totalorder %v971, 2
    %vm973 = vcmp.eq.s32.totalorder %v971, 0
    %v974 = vxor.u32 %v968, 2147483648
    %v975 = vsel %vm973, %v960, %v974
    %vm976 = vcmp.eq.s32.totalorder %v971, 2
    %v977 = vxor.u32 %v960, 2147483648
    %v978 = vsel %vm976, %v977, %v968
    %v979 = vsel %vm972, %v975, %v978
    %v980 = vsel %vm969, nan, %v979
    %v981 = vmul.f32 %v980, %v825
    %v982 = vand.u32 2147483647, %v810
    %vm983 = vcmp.le.f32.partialorder %v982, 0.7853982
    %vm984 = vcmp.lt.s32.totalorder %v810, 0
    %v985 = vand.u32 %v810, 2139095040
    %v986 = vshrl.u32 %v985, 23
    %v987 = vsub.s32 %v986, 127
    %v988 = vand.u32 2147483647, %v810
    %v989 = vand.u32 %v988, 8388607
    %v990 = vor.u32 %v989, 8388608
    %v991 = vsub.s32 0, %v990
    %v992 = vadd.s32 %v987, 1
    %vm993 = vcmp.gt.s32.totalorder %v992, 0
    %v994 = vsel %vm993, %v992, 0
    %v995 = vshrl.u32 %v994, 5
    %v996 = vand.u32 %v994, 31
    %v997 = vsub.s32 32, %v996
    %v998 = vshrl.u32 683565275, %v997
    %v999 = vshll.u32 683565275, %v996
    %v1000 = vshrl.u32 2475754826, %v997
    %v1001 = vor.u32 %v999, %v1000
    %v1002 = vshll.u32 2475754826, %v996
    %v1003 = vshrl.u32 2131351028, %v997
    %v1004 = vor.u32 %v1002, %v1003
    %v1005 = vshll.u32 2131351028, %v996
    %v1006 = vshrl.u32 2102212464, %v997
    %v1007 = vor.u32 %v1005, %v1006
    %v1008 = vshll.u32 2102212464, %v996
    %v1009 = vshrl.u32 920167782, %v997
    %v1010 = vor.u32 %v1008, %v1009
    %v1011 = vshll.u32 920167782, %v996
    %v1012 = vshrl.u32 1326507024, %v997
    %v1013 = vor.u32 %v1011, %v1012
    %vm1014 = vcmp.lt.s32.totalorder %v995, 1
    %vm1015 = vcmp.lt.s32.totalorder %v995, 2
    %vm1016 = vcmp.lt.s32.totalorder %v995, 3
    %vm1017 = vcmp.lt.s32.totalorder %v995, 4
    %v1018 = vsel %vm1014, %v998, %v1001
    %v1019 = vsel %vm1017, %v1007, 2102212464
    %v1020 = vsel %vm1016, %v1004, %v1019
    %v1021 = vsel %vm1015, %v1018, %v1020
    %v1022 = vsel %vm1014, %v1001, %v1004
    %v1023 = vsel %vm1017, %v1010, 920167782
    %v1024 = vsel %vm1016, %v1007, %v1023
    %v1025 = vsel %vm1015, %v1022, %v1024
    %v1026 = vsel %vm1014, %v1004, %v1007
    %v1027 = vsel %vm1017, %v1013, 1326507024
    %v1028 = vsel %vm1016, %v1010, %v1027
    %v1029 = vsel %vm1015, %v1026, %v1028
    %v1030 = vshll.u32 %v990, 8
    %v1031 = vand.u32 %v1030, 65535
    %v1032 = vshrl.u32 %v1030, 16
    %v1033 = vand.u32 %v1029, 65535
    %v1034 = vshrl.u32 %v1029, 16
    %v1035 = vmul.u32 %v1031, %v1033
    %v1036 = vmul.u32 %v1031, %v1034
    %v1037 = vmul.u32 %v1032, %v1033
    %v1038 = vmul.u32 %v1032, %v1034
    %v1039 = vshll.u32 %v1036, 16
    %v1040 = vshrl.u32 %v1036, 16
    %v1041 = vshll.u32 %v1037, 16
    %v1042 = vshrl.u32 %v1037, 16
    %vm1043 = vc.u32 %v1035, %v1039
    %v1044 = vsel %vm1043, 1, 0
    %v1045 = vadd.s32 %v1035, %v1039
    %v1046 = vadd.s32 %v1038, %v1044
    %vm1047 = vc.u32 %v1045, %v1041
    %v1048 = vsel %vm1047, 1, 0
    %v1049 = vadd.s32 %v1045, %v1041
    %v1050 = vadd.s32 %v1046, %v1048
    %v1051 = vadd.s32 %v1050, %v1040
    %v1052 = vadd.s32 %v1051, %v1042
    %v1053 = vand.u32 %v1030, 65535
    %v1054 = vshrl.u32 %v1030, 16
    %v1055 = vand.u32 %v1025, 65535
    %v1056 = vshrl.u32 %v1025, 16
    %v1057 = vmul.u32 %v1053, %v1055
    %v1058 = vmul.u32 %v1053, %v1056
    %v1059 = vmul.u32 %v1054, %v1055
    %v1060 = vmul.u32 %v1054, %v1056
    %v1061 = vshll.u32 %v1058, 16
    %v1062 = vshrl.u32 %v1058, 16
    %v1063 = vshll.u32 %v1059, 16
    %v1064 = vshrl.u32 %v1059, 16
    %vm1065 = vc.u32 %v1057, %v1061
    %v1066 = vsel %vm1065, 1, 0
    %v1067 = vadd.s32 %v1057, %v1061
    %v1068 = vadd.s32 %v1060, %v1066
    %vm1069 = vc.u32 %v1067, %v1063
    %v1070 = vsel %vm1069, 1, 0
    %v1071 = vadd.s32 %v1067, %v1063
    %v1072 = vadd.s32 %v1068, %v1070
    %v1073 = vadd.s32 %v1072, %v1062
    %v1074 = vadd.s32 %v1073, %v1064
    %v1075 = vmul.u32 %v1030, %v1021
    %v1076 = vadd.s32 %v1052, %v1071
    %vm1077 = vc.u32 %v1052, %v1071
    %v1078 = vadd.s32 %v1074, 1
    %v1079 = vsel %vm1077, %v1078, %v1074
    %v1080 = vadd.s32 %v1075, %v1079
    %v1081 = vadd.s32 %v1080, 536870912
    %v1082 = vshrl.u32 %v1081, 30
    %v1083 = vshll.u32 %v1082, 30
    %v1084 = vsub.s32 %v1080, %v1083
    %vm1085 = vcmp.lt.s32.totalorder %v1084, 0
    %v1086 = vsub.s32 0, %v1084
    %v1087 = vsel %vm1085, %v1086, %v1084
    %v1088 = vclz %v1087
    %v1089 = vsub.s32 %v1088, 2
    %vm1090 = vcmp.gt.s32.totalorder 0, %v1089
    %v1091 = vsel %vm1090, 0, %v1089
    %v1092 = vsub.s32 32, %v1091
    %v1093 = vshll.u32 %v1084, %v1091
    %v1094 = vshrl.u32 %v1076, %v1092
    %v1095 = vor.u32 %v1093, %v1094
    %v1096 = vsub.s32 4294967266, %v1091
    %v1097 = vadd.s32 %v1096, 127
    %v1098 = vshll.u32 %v1097, 23
    %v1099 = vor.u32 4788187, %v1098
    %v1100 = vand.u32 2147483647, %v1099
    %v1102 = vcvt.s32.f32 %v1095
    %v1103 = vmul.f32 %v1102, %v1100
    %v1104 = vxor.u32 %v1103, 2147483648
    %v1105 = vsel %vm984, %v1104, %v1103
    %v1106 = vsub.s32 4, %v1082
    %v1107 = vsel %vm984, %v1106, %v1082
    %v1108 = vsel %vm983, %v810, %v1105
    %v1109 = vsel %vm983, 0, %v1107
    %v1110 = vmul.f32 %v1108, %v1108
    %v1111 = vmul.f32 %v1110, -0.001358992
    %v1112 = vadd.f32 %v1111, 0.041655596
    %v1113 = vmul.f32 %v1110, %v1112
    %v1114 = vadd.f32 %v1113, -0.4999988
    %v1115 = vmul.f32 %v1110, %v1114
    %v1116 = vadd.f32 1.0, %v1115
    %v1117 = vmul.f32 %v1108, %v1108
    %v1118 = vmul.f32 %v1117, -0.00019511016
    %v1119 = vadd.f32 %v1118, 0.008332121
    %v1120 = vmul.f32 %v1117, %v1119
    %v1121 = vadd.f32 %v1120, -0.16666654
    %v1122 = vmul.f32 %v1117, %v1121
    %v1123 = vadd.f32 %v1122, 1.0
    %v1124 = vmul.f32 %v1123, %v1108
    %vm1125 = vweird.f32 %v810
    %v1126 = vand.u32 %v1109, 3
    %vm1127 = vcmp.lt.s32.totalorder %v1126, 2
    %vm1128 = vcmp.eq.s32.totalorder %v1126, 0
    %v1129 = vxor.u32 %v1124, 2147483648
    %v1130 = vsel %vm1128, %v1116, %v1129
    %vm1131 = vcmp.eq.s32.totalorder %v1126, 2
    %v1132 = vxor.u32 %v1116, 2147483648
    %v1133 = vsel %vm1131, %v1132, %v1124
    %v1134 = vsel %vm1127, %v1130, %v1133
    %v1135 = vsel %vm1125, nan, %v1134
    %v1136 = vsub.f32 %v981, %v1135
    %v1137 = vmul.f32 %v1136, %v825
    %v1138 = vmul.f32 %v825, 3.0
    %v1139 = vmul.f32 %v1138, %v1137
    %v1140 = vsub.f32 %v1139, %v981
    %1142 = vset.pattern.permute.xlu0 2
    %1143 = vperm.xlu0 %1142, %v804
    %v1144 = vpop.permute.xlu0 %1143
    %v1146 = vmul.f32 %v1144, %v1140
    %v1147 = vmul.f32 %v445, %v1146
    %v1149 = vperm.slane %v802, 0
    %v1151 = vmul.f32 %v1147, %v1149
    %1152 = vst [vmem:[#allocation10 + $0xc] sm:$0x3f] %v1151
    %v1153 = vmul.f32 %v255, 1.8658817
    %v1154 = vadd.f32 %v1153, 0.0
    %v1155 = vmul.f32 %v1154, %v255
    %v1156 = vadd.f32 %v1155, -1.119529
    %v1157 = vmul.f32 %v1156, %v255
    %v1158 = vadd.f32 %v1157, 0.0
    %v1159 = vld [vmem:[#allocation7] sm:$0x3f]
    %v1160 = vld [vmem:[#allocation8] sm:$0x3f]
    %1162 = vset.pattern.permute.xlu0 3
    %1163 = vperm.xlu0 %1162, %v1159
    %v1164 = vpop.permute.xlu0 %1163
    %v1166 = vmul.f32 %v1164, %v264
    %v1167 = vrcp.pop %v1166
    %v1168 = vmul.f32 %v1166, %v1167
    %v1169 = vsub.f32 1.0, %v1168
    %v1170 = vmul.f32 %v1167, %v1169
    %v1171 = vadd.f32 %v1167, %v1170
    %vm1172 = vweird.f32 %v1166
    %vm1173 = vweird.f32 %v1167
    %vm1174 = vmor %vm1172, %vm1173
    %v1175 = vsel %vm1174, %v1167, %v1171
    %v1176 = vand.u32 2147483647, %v1166
    %vm1177 = vcmp.eq.f32.partialorder %v1176, 8.507059e+37
    %v1178 = vand.u32 %v1166, 2147483648
    %v1179 = vor.u32 1.1754944e-38, %v1178
    %v1180 = vsel %vm1177, %v1179, %v1175
    %v1181 = vmul.f32 1.0, %v1180
    %v1182 = vand.u32 2147483647, %v1166
    %vm1183 = vcmp.le.f32.partialorder %v1182, 0.7853982
    %vm1184 = vcmp.lt.s32.totalorder %v1166, 0
    %v1185 = vand.u32 %v1166, 2139095040
    %v1186 = vshrl.u32 %v1185, 23
    %v1187 = vsub.s32 %v1186, 127
    %v1188 = vand.u32 2147483647, %v1166
    %v1189 = vand.u32 %v1188, 8388607
    %v1190 = vor.u32 %v1189, 8388608
    %v1191 = vsub.s32 0, %v1190
    %v1192 = vadd.s32 %v1187, 1
    %vm1193 = vcmp.gt.s32.totalorder %v1192, 0
    %v1194 = vsel %vm1193, %v1192, 0
    %v1195 = vshrl.u32 %v1194, 5
    %v1196 = vand.u32 %v1194, 31
    %v1197 = vsub.s32 32, %v1196
    %v1198 = vshrl.u32 683565275, %v1197
    %v1199 = vshll.u32 683565275, %v1196
    %v1200 = vshrl.u32 2475754826, %v1197
    %v1201 = vor.u32 %v1199, %v1200
    %v1202 = vshll.u32 2475754826, %v1196
    %v1203 = vshrl.u32 2131351028, %v1197
    %v1204 = vor.u32 %v1202, %v1203
    %v1205 = vshll.u32 2131351028, %v1196
    %v1206 = vshrl.u32 2102212464, %v1197
    %v1207 = vor.u32 %v1205, %v1206
    %v1208 = vshll.u32 2102212464, %v1196
    %v1209 = vshrl.u32 920167782, %v1197
    %v1210 = vor.u32 %v1208, %v1209
    %v1211 = vshll.u32 920167782, %v1196
    %v1212 = vshrl.u32 1326507024, %v1197
    %v1213 = vor.u32 %v1211, %v1212
    %vm1214 = vcmp.lt.s32.totalorder %v1195, 1
    %vm1215 = vcmp.lt.s32.totalorder %v1195, 2
    %vm1216 = vcmp.lt.s32.totalorder %v1195, 3
    %vm1217 = vcmp.lt.s32.totalorder %v1195, 4
    %v1218 = vsel %vm1214, %v1198, %v1201
    %v1219 = vsel %vm1217, %v1207, 2102212464
    %v1220 = vsel %vm1216, %v1204, %v1219
    %v1221 = vsel %vm1215, %v1218, %v1220
    %v1222 = vsel %vm1214, %v1201, %v1204
    %v1223 = vsel %vm1217, %v1210, 920167782
    %v1224 = vsel %vm1216, %v1207, %v1223
    %v1225 = vsel %vm1215, %v1222, %v1224
    %v1226 = vsel %vm1214, %v1204, %v1207
    %v1227 = vsel %vm1217, %v1213, 1326507024
    %v1228 = vsel %vm1216, %v1210, %v1227
    %v1229 = vsel %vm1215, %v1226, %v1228
    %v1230 = vshll.u32 %v1190, 8
    %v1231 = vand.u32 %v1230, 65535
    %v1232 = vshrl.u32 %v1230, 16
    %v1233 = vand.u32 %v1229, 65535
    %v1234 = vshrl.u32 %v1229, 16
    %v1235 = vmul.u32 %v1231, %v1233
    %v1236 = vmul.u32 %v1231, %v1234
    %v1237 = vmul.u32 %v1232, %v1233
    %v1238 = vmul.u32 %v1232, %v1234
    %v1239 = vshll.u32 %v1236, 16
    %v1240 = vshrl.u32 %v1236, 16
    %v1241 = vshll.u32 %v1237, 16
    %v1242 = vshrl.u32 %v1237, 16
    %vm1243 = vc.u32 %v1235, %v1239
    %v1244 = vsel %vm1243, 1, 0
    %v1245 = vadd.s32 %v1235, %v1239
    %v1246 = vadd.s32 %v1238, %v1244
    %vm1247 = vc.u32 %v1245, %v1241
    %v1248 = vsel %vm1247, 1, 0
    %v1249 = vadd.s32 %v1245, %v1241
    %v1250 = vadd.s32 %v1246, %v1248
    %v1251 = vadd.s32 %v1250, %v1240
    %v1252 = vadd.s32 %v1251, %v1242
    %v1253 = vand.u32 %v1230, 65535
    %v1254 = vshrl.u32 %v1230, 16
    %v1255 = vand.u32 %v1225, 65535
    %v1256 = vshrl.u32 %v1225, 16
    %v1257 = vmul.u32 %v1253, %v1255
    %v1258 = vmul.u32 %v1253, %v1256
    %v1259 = vmul.u32 %v1254, %v1255
    %v1260 = vmul.u32 %v1254, %v1256
    %v1261 = vshll.u32 %v1258, 16
    %v1262 = vshrl.u32 %v1258, 16
    %v1263 = vshll.u32 %v1259, 16
    %v1264 = vshrl.u32 %v1259, 16
    %vm1265 = vc.u32 %v1257, %v1261
    %v1266 = vsel %vm1265, 1, 0
    %v1267 = vadd.s32 %v1257, %v1261
    %v1268 = vadd.s32 %v1260, %v1266
    %vm1269 = vc.u32 %v1267, %v1263
    %v1270 = vsel %vm1269, 1, 0
    %v1271 = vadd.s32 %v1267, %v1263
    %v1272 = vadd.s32 %v1268, %v1270
    %v1273 = vadd.s32 %v1272, %v1262
    %v1274 = vadd.s32 %v1273, %v1264
    %v1275 = vmul.u32 %v1230, %v1221
    %v1276 = vadd.s32 %v1252, %v1271
    %vm1277 = vc.u32 %v1252, %v1271
    %v1278 = vadd.s32 %v1274, 1
    %v1279 = vsel %vm1277, %v1278, %v1274
    %v1280 = vadd.s32 %v1275, %v1279
    %v1281 = vadd.s32 %v1280, 536870912
    %v1282 = vshrl.u32 %v1281, 30
    %v1283 = vshll.u32 %v1282, 30
    %v1284 = vsub.s32 %v1280, %v1283
    %vm1285 = vcmp.lt.s32.totalorder %v1284, 0
    %v1286 = vsub.s32 0, %v1284
    %v1287 = vsel %vm1285, %v1286, %v1284
    %v1288 = vclz %v1287
    %v1289 = vsub.s32 %v1288, 2
    %vm1290 = vcmp.gt.s32.totalorder 0, %v1289
    %v1291 = vsel %vm1290, 0, %v1289
    %v1292 = vsub.s32 32, %v1291
    %v1293 = vshll.u32 %v1284, %v1291
    %v1294 = vshrl.u32 %v1276, %v1292
    %v1295 = vor.u32 %v1293, %v1294
    %v1296 = vsub.s32 4294967266, %v1291
    %v1297 = vadd.s32 %v1296, 127
    %v1298 = vshll.u32 %v1297, 23
    %v1299 = vor.u32 4788187, %v1298
    %v1300 = vand.u32 2147483647, %v1299
    %v1302 = vcvt.s32.f32 %v1295
    %v1303 = vmul.f32 %v1302, %v1300
    %v1304 = vxor.u32 %v1303, 2147483648
    %v1305 = vsel %vm1184, %v1304, %v1303
    %v1306 = vsub.s32 4, %v1282
    %v1307 = vsel %vm1184, %v1306, %v1282
    %v1308 = vsel %vm1183, %v1166, %v1305
    %v1309 = vsel %vm1183, 0, %v1307
    %v1310 = vmul.f32 %v1308, %v1308
    %v1311 = vmul.f32 %v1310, -0.001358992
    %v1312 = vadd.f32 %v1311, 0.041655596
    %v1313 = vmul.f32 %v1310, %v1312
    %v1314 = vadd.f32 %v1313, -0.4999988
    %v1315 = vmul.f32 %v1310, %v1314
    %v1316 = vadd.f32 1.0, %v1315
    %v1317 = vmul.f32 %v1308, %v1308
    %v1318 = vmul.f32 %v1317, -0.00019511016
    %v1319 = vadd.f32 %v1318, 0.008332121
    %v1320 = vmul.f32 %v1317, %v1319
    %v1321 = vadd.f32 %v1320, -0.16666654
    %v1322 = vmul.f32 %v1317, %v1321
    %v1323 = vadd.f32 %v1322, 1.0
    %v1324 = vmul.f32 %v1323, %v1308
    %vm1325 = vweird.f32 %v1166
    %v1326 = vadd.s32 %v1309, 3
    %v1327 = vand.u32 %v1326, 3
    %vm1328 = vcmp.lt.s32.totalorder %v1327, 2
    %vm1329 = vcmp.eq.s32.totalorder %v1327, 0
    %v1330 = vxor.u32 %v1324, 2147483648
    %v1331 = vsel %vm1329, %v1316, %v1330
    %vm1332 = vcmp.eq.s32.totalorder %v1327, 2
    %v1333 = vxor.u32 %v1316, 2147483648
    %v1334 = vsel %vm1332, %v1333, %v1324
    %v1335 = vsel %vm1328, %v1331, %v1334
    %v1336 = vsel %vm1325, nan, %v1335
    %v1337 = vmul.f32 %v1336, %v1181
    %v1338 = vand.u32 2147483647, %v1166
    %vm1339 = vcmp.le.f32.partialorder %v1338, 0.7853982
    %vm1340 = vcmp.lt.s32.totalorder %v1166, 0
    %v1341 = vand.u32 %v1166, 2139095040
    %v1342 = vshrl.u32 %v1341, 23
    %v1343 = vsub.s32 %v1342, 127
    %v1344 = vand.u32 2147483647, %v1166
    %v1345 = vand.u32 %v1344, 8388607
    %v1346 = vor.u32 %v1345, 8388608
    %v1347 = vsub.s32 0, %v1346
    %v1348 = vadd.s32 %v1343, 1
    %vm1349 = vcmp.gt.s32.totalorder %v1348, 0
    %v1350 = vsel %vm1349, %v1348, 0
    %v1351 = vshrl.u32 %v1350, 5
    %v1352 = vand.u32 %v1350, 31
    %v1353 = vsub.s32 32, %v1352
    %v1354 = vshrl.u32 683565275, %v1353
    %v1355 = vshll.u32 683565275, %v1352
    %v1356 = vshrl.u32 2475754826, %v1353
    %v1357 = vor.u32 %v1355, %v1356
    %v1358 = vshll.u32 2475754826, %v1352
    %v1359 = vshrl.u32 2131351028, %v1353
    %v1360 = vor.u32 %v1358, %v1359
    %v1361 = vshll.u32 2131351028, %v1352
    %v1362 = vshrl.u32 2102212464, %v1353
    %v1363 = vor.u32 %v1361, %v1362
    %v1364 = vshll.u32 2102212464, %v1352
    %v1365 = vshrl.u32 920167782, %v1353
    %v1366 = vor.u32 %v1364, %v1365
    %v1367 = vshll.u32 920167782, %v1352
    %v1368 = vshrl.u32 1326507024, %v1353
    %v1369 = vor.u32 %v1367, %v1368
    %vm1370 = vcmp.lt.s32.totalorder %v1351, 1
    %vm1371 = vcmp.lt.s32.totalorder %v1351, 2
    %vm1372 = vcmp.lt.s32.totalorder %v1351, 3
    %vm1373 = vcmp.lt.s32.totalorder %v1351, 4
    %v1374 = vsel %vm1370, %v1354, %v1357
    %v1375 = vsel %vm1373, %v1363, 2102212464
    %v1376 = vsel %vm1372, %v1360, %v1375
    %v1377 = vsel %vm1371, %v1374, %v1376
    %v1378 = vsel %vm1370, %v1357, %v1360
    %v1379 = vsel %vm1373, %v1366, 920167782
    %v1380 = vsel %vm1372, %v1363, %v1379
    %v1381 = vsel %vm1371, %v1378, %v1380
    %v1382 = vsel %vm1370, %v1360, %v1363
    %v1383 = vsel %vm1373, %v1369, 1326507024
    %v1384 = vsel %vm1372, %v1366, %v1383
    %v1385 = vsel %vm1371, %v1382, %v1384
    %v1386 = vshll.u32 %v1346, 8
    %v1387 = vand.u32 %v1386, 65535
    %v1388 = vshrl.u32 %v1386, 16
    %v1389 = vand.u32 %v1385, 65535
    %v1390 = vshrl.u32 %v1385, 16
    %v1391 = vmul.u32 %v1387, %v1389
    %v1392 = vmul.u32 %v1387, %v1390
    %v1393 = vmul.u32 %v1388, %v1389
    %v1394 = vmul.u32 %v1388, %v1390
    %v1395 = vshll.u32 %v1392, 16
    %v1396 = vshrl.u32 %v1392, 16
    %v1397 = vshll.u32 %v1393, 16
    %v1398 = vshrl.u32 %v1393, 16
    %vm1399 = vc.u32 %v1391, %v1395
    %v1400 = vsel %vm1399, 1, 0
    %v1401 = vadd.s32 %v1391, %v1395
    %v1402 = vadd.s32 %v1394, %v1400
    %vm1403 = vc.u32 %v1401, %v1397
    %v1404 = vsel %vm1403, 1, 0
    %v1405 = vadd.s32 %v1401, %v1397
    %v1406 = vadd.s32 %v1402, %v1404
    %v1407 = vadd.s32 %v1406, %v1396
    %v1408 = vadd.s32 %v1407, %v1398
    %v1409 = vand.u32 %v1386, 65535
    %v1410 = vshrl.u32 %v1386, 16
    %v1411 = vand.u32 %v1381, 65535
    %v1412 = vshrl.u32 %v1381, 16
    %v1413 = vmul.u32 %v1409, %v1411
    %v1414 = vmul.u32 %v1409, %v1412
    %v1415 = vmul.u32 %v1410, %v1411
    %v1416 = vmul.u32 %v1410, %v1412
    %v1417 = vshll.u32 %v1414, 16
    %v1418 = vshrl.u32 %v1414, 16
    %v1419 = vshll.u32 %v1415, 16
    %v1420 = vshrl.u32 %v1415, 16
    %vm1421 = vc.u32 %v1413, %v1417
    %v1422 = vsel %vm1421, 1, 0
    %v1423 = vadd.s32 %v1413, %v1417
    %v1424 = vadd.s32 %v1416, %v1422
    %vm1425 = vc.u32 %v1423, %v1419
    %v1426 = vsel %vm1425, 1, 0
    %v1427 = vadd.s32 %v1423, %v1419
    %v1428 = vadd.s32 %v1424, %v1426
    %v1429 = vadd.s32 %v1428, %v1418
    %v1430 = vadd.s32 %v1429, %v1420
    %v1431 = vmul.u32 %v1386, %v1377
    %v1432 = vadd.s32 %v1408, %v1427
    %vm1433 = vc.u32 %v1408, %v1427
    %v1434 = vadd.s32 %v1430, 1
    %v1435 = vsel %vm1433, %v1434, %v1430
    %v1436 = vadd.s32 %v1431, %v1435
    %v1437 = vadd.s32 %v1436, 536870912
    %v1438 = vshrl.u32 %v1437, 30
    %v1439 = vshll.u32 %v1438, 30
    %v1440 = vsub.s32 %v1436, %v1439
    %vm1441 = vcmp.lt.s32.totalorder %v1440, 0
    %v1442 = vsub.s32 0, %v1440
    %v1443 = vsel %vm1441, %v1442, %v1440
    %v1444 = vclz %v1443
    %v1445 = vsub.s32 %v1444, 2
    %vm1446 = vcmp.gt.s32.totalorder 0, %v1445
    %v1447 = vsel %vm1446, 0, %v1445
    %v1448 = vsub.s32 32, %v1447
    %v1449 = vshll.u32 %v1440, %v1447
    %v1450 = vshrl.u32 %v1432, %v1448
    %v1451 = vor.u32 %v1449, %v1450
    %v1452 = vsub.s32 4294967266, %v1447
    %v1453 = vadd.s32 %v1452, 127
    %v1454 = vshll.u32 %v1453, 23
    %v1455 = vor.u32 4788187, %v1454
    %v1456 = vand.u32 2147483647, %v1455
    %v1458 = vcvt.s32.f32 %v1451
    %v1459 = vmul.f32 %v1458, %v1456
    %v1460 = vxor.u32 %v1459, 2147483648
    %v1461 = vsel %vm1340, %v1460, %v1459
    %v1462 = vsub.s32 4, %v1438
    %v1463 = vsel %vm1340, %v1462, %v1438
    %v1464 = vsel %vm1339, %v1166, %v1461
    %v1465 = vsel %vm1339, 0, %v1463
    %v1466 = vmul.f32 %v1464, %v1464
    %v1467 = vmul.f32 %v1466, -0.001358992
    %v1468 = vadd.f32 %v1467, 0.041655596
    %v1469 = vmul.f32 %v1466, %v1468
    %v1470 = vadd.f32 %v1469, -0.4999988
    %v1471 = vmul.f32 %v1466, %v1470
    %v1472 = vadd.f32 1.0, %v1471
    %v1473 = vmul.f32 %v1464, %v1464
    %v1474 = vmul.f32 %v1473, -0.00019511016
    %v1475 = vadd.f32 %v1474, 0.008332121
    %v1476 = vmul.f32 %v1473, %v1475
    %v1477 = vadd.f32 %v1476, -0.16666654
    %v1478 = vmul.f32 %v1473, %v1477
    %v1479 = vadd.f32 %v1478, 1.0
    %v1480 = vmul.f32 %v1479, %v1464
    %vm1481 = vweird.f32 %v1166
    %v1482 = vand.u32 %v1465, 3
    %vm1483 = vcmp.lt.s32.totalorder %v1482, 2
    %vm1484 = vcmp.eq.s32.totalorder %v1482, 0
    %v1485 = vxor.u32 %v1480, 2147483648
    %v1486 = vsel %vm1484, %v1472, %v1485
    %vm1487 = vcmp.eq.s32.totalorder %v1482, 2
    %v1488 = vxor.u32 %v1472, 2147483648
    %v1489 = vsel %vm1487, %v1488, %v1480
    %v1490 = vsel %vm1483, %v1486, %v1489
    %v1491 = vsel %vm1481, nan, %v1490
    %v1492 = vsub.f32 %v1337, %v1491
    %v1493 = vmul.f32 %v1492, %v1181
    %v1494 = vmul.f32 %v1181, 3.0
    %v1495 = vmul.f32 %v1494, %v1493
    %v1496 = vsub.f32 %v1495, %v1337
    %v1497 = vmul.f32 %v1181, 5.0
    %v1498 = vmul.f32 %v1497, %v1496
    %v1499 = vsub.f32 %v1498, %v1493
    %1501 = vset.pattern.permute.xlu0 3
    %1502 = vperm.xlu0 %1501, %v1160
    %v1503 = vpop.permute.xlu0 %1502
    %v1505 = vmul.f32 %v1503, %v1499
    %v1506 = vmul.f32 %v445, %v1505
    %v1508 = vperm.slane %v1158, 0
    %v1510 = vmul.f32 %v1506, %v1508
    %1511 = vst [vmem:[#allocation10 + $0x12] sm:$0x3f] %v1510
    %v1512 = vmul.f32 %v255, 3.7024941
    %v1513 = vadd.f32 %v1512, 0.0
    %v1514 = vmul.f32 %v1513, %v255
    %v1515 = vadd.f32 %v1514, -3.1735663
    %v1516 = vmul.f32 %v1515, %v255
    %v1517 = vadd.f32 %v1516, 0.0
    %v1518 = vmul.f32 %v1517, %v255
    %v1519 = vadd.f32 %v1518, 0.31735665
    %v1520 = vld [vmem:[#allocation7] sm:$0x3f]
    %v1521 = vld [vmem:[#allocation8] sm:$0x3f]
    %1523 = vset.pattern.permute.xlu0 4
    %1524 = vperm.xlu0 %1523, %v1520
    %v1525 = vpop.permute.xlu0 %1524
    %v1527 = vmul.f32 %v1525, %v264
    %v1528 = vrcp.pop %v1527
    %v1529 = vmul.f32 %v1527, %v1528
    %v1530 = vsub.f32 1.0, %v1529
    %v1531 = vmul.f32 %v1528, %v1530
    %v1532 = vadd.f32 %v1528, %v1531
    %vm1533 = vweird.f32 %v1527
    %vm1534 = vweird.f32 %v1528
    %vm1535 = vmor %vm1533, %vm1534
    %v1536 = vsel %vm1535, %v1528, %v1532
    %v1537 = vand.u32 2147483647, %v1527
    %vm1538 = vcmp.eq.f32.partialorder %v1537, 8.507059e+37
    %v1539 = vand.u32 %v1527, 2147483648
    %v1540 = vor.u32 1.1754944e-38, %v1539
    %v1541 = vsel %vm1538, %v1540, %v1536
    %v1542 = vmul.f32 1.0, %v1541
    %v1543 = vand.u32 2147483647, %v1527
    %vm1544 = vcmp.le.f32.partialorder %v1543, 0.7853982
    %vm1545 = vcmp.lt.s32.totalorder %v1527, 0
    %v1546 = vand.u32 %v1527, 2139095040
    %v1547 = vshrl.u32 %v1546, 23
    %v1548 = vsub.s32 %v1547, 127
    %v1549 = vand.u32 2147483647, %v1527
    %v1550 = vand.u32 %v1549, 8388607
    %v1551 = vor.u32 %v1550, 8388608
    %v1552 = vsub.s32 0, %v1551
    %v1553 = vadd.s32 %v1548, 1
    %vm1554 = vcmp.gt.s32.totalorder %v1553, 0
    %v1555 = vsel %vm1554, %v1553, 0
    %v1556 = vshrl.u32 %v1555, 5
    %v1557 = vand.u32 %v1555, 31
    %v1558 = vsub.s32 32, %v1557
    %v1559 = vshrl.u32 683565275, %v1558
    %v1560 = vshll.u32 683565275, %v1557
    %v1561 = vshrl.u32 2475754826, %v1558
    %v1562 = vor.u32 %v1560, %v1561
    %v1563 = vshll.u32 2475754826, %v1557
    %v1564 = vshrl.u32 2131351028, %v1558
    %v1565 = vor.u32 %v1563, %v1564
    %v1566 = vshll.u32 2131351028, %v1557
    %v1567 = vshrl.u32 2102212464, %v1558
    %v1568 = vor.u32 %v1566, %v1567
    %v1569 = vshll.u32 2102212464, %v1557
    %v1570 = vshrl.u32 920167782, %v1558
    %v1571 = vor.u32 %v1569, %v1570
    %v1572 = vshll.u32 920167782, %v1557
    %v1573 = vshrl.u32 1326507024, %v1558
    %v1574 = vor.u32 %v1572, %v1573
    %vm1575 = vcmp.lt.s32.totalorder %v1556, 1
    %vm1576 = vcmp.lt.s32.totalorder %v1556, 2
    %vm1577 = vcmp.lt.s32.totalorder %v1556, 3
    %vm1578 = vcmp.lt.s32.totalorder %v1556, 4
    %v1579 = vsel %vm1575, %v1559, %v1562
    %v1580 = vsel %vm1578, %v1568, 2102212464
    %v1581 = vsel %vm1577, %v1565, %v1580
    %v1582 = vsel %vm1576, %v1579, %v1581
    %v1583 = vsel %vm1575, %v1562, %v1565
    %v1584 = vsel %vm1578, %v1571, 920167782
    %v1585 = vsel %vm1577, %v1568, %v1584
    %v1586 = vsel %vm1576, %v1583, %v1585
    %v1587 = vsel %vm1575, %v1565, %v1568
    %v1588 = vsel %vm1578, %v1574, 1326507024
    %v1589 = vsel %vm1577, %v1571, %v1588
    %v1590 = vsel %vm1576, %v1587, %v1589
    %v1591 = vshll.u32 %v1551, 8
    %v1592 = vand.u32 %v1591, 65535
    %v1593 = vshrl.u32 %v1591, 16
    %v1594 = vand.u32 %v1590, 65535
    %v1595 = vshrl.u32 %v1590, 16
    %v1596 = vmul.u32 %v1592, %v1594
    %v1597 = vmul.u32 %v1592, %v1595
    %v1598 = vmul.u32 %v1593, %v1594
    %v1599 = vmul.u32 %v1593, %v1595
    %v1600 = vshll.u32 %v1597, 16
    %v1601 = vshrl.u32 %v1597, 16
    %v1602 = vshll.u32 %v1598, 16
    %v1603 = vshrl.u32 %v1598, 16
    %vm1604 = vc.u32 %v1596, %v1600
    %v1605 = vsel %vm1604, 1, 0
    %v1606 = vadd.s32 %v1596, %v1600
    %v1607 = vadd.s32 %v1599, %v1605
    %vm1608 = vc.u32 %v1606, %v1602
    %v1609 = vsel %vm1608, 1, 0
    %v1610 = vadd.s32 %v1606, %v1602
    %v1611 = vadd.s32 %v1607, %v1609
    %v1612 = vadd.s32 %v1611, %v1601
    %v1613 = vadd.s32 %v1612, %v1603
    %v1614 = vand.u32 %v1591, 65535
    %v1615 = vshrl.u32 %v1591, 16
    %v1616 = vand.u32 %v1586, 65535
    %v1617 = vshrl.u32 %v1586, 16
    %v1618 = vmul.u32 %v1614, %v1616
    %v1619 = vmul.u32 %v1614, %v1617
    %v1620 = vmul.u32 %v1615, %v1616
    %v1621 = vmul.u32 %v1615, %v1617
    %v1622 = vshll.u32 %v1619, 16
    %v1623 = vshrl.u32 %v1619, 16
    %v1624 = vshll.u32 %v1620, 16
    %v1625 = vshrl.u32 %v1620, 16
    %vm1626 = vc.u32 %v1618, %v1622
    %v1627 = vsel %vm1626, 1, 0
    %v1628 = vadd.s32 %v1618, %v1622
    %v1629 = vadd.s32 %v1621, %v1627
    %vm1630 = vc.u32 %v1628, %v1624
    %v1631 = vsel %vm1630, 1, 0
    %v1632 = vadd.s32 %v1628, %v1624
    %v1633 = vadd.s32 %v1629, %v1631
    %v1634 = vadd.s32 %v1633, %v1623
    %v1635 = vadd.s32 %v1634, %v1625
    %v1636 = vmul.u32 %v1591, %v1582
    %v1637 = vadd.s32 %v1613, %v1632
    %vm1638 = vc.u32 %v1613, %v1632
    %v1639 = vadd.s32 %v1635, 1
    %v1640 = vsel %vm1638, %v1639, %v1635
    %v1641 = vadd.s32 %v1636, %v1640
    %v1642 = vadd.s32 %v1641, 536870912
    %v1643 = vshrl.u32 %v1642, 30
    %v1644 = vshll.u32 %v1643, 30
    %v1645 = vsub.s32 %v1641, %v1644
    %vm1646 = vcmp.lt.s32.totalorder %v1645, 0
    %v1647 = vsub.s32 0, %v1645
    %v1648 = vsel %vm1646, %v1647, %v1645
    %v1649 = vclz %v1648
    %v1650 = vsub.s32 %v1649, 2
    %vm1651 = vcmp.gt.s32.totalorder 0, %v1650
    %v1652 = vsel %vm1651, 0, %v1650
    %v1653 = vsub.s32 32, %v1652
    %v1654 = vshll.u32 %v1645, %v1652
    %v1655 = vshrl.u32 %v1637, %v1653
    %v1656 = vor.u32 %v1654, %v1655
    %v1657 = vsub.s32 4294967266, %v1652
    %v1658 = vadd.s32 %v1657, 127
    %v1659 = vshll.u32 %v1658, 23
    %v1660 = vor.u32 4788187, %v1659
    %v1661 = vand.u32 2147483647, %v1660
    %v1663 = vcvt.s32.f32 %v1656
    %v1664 = vmul.f32 %v1663, %v1661
    %v1665 = vxor.u32 %v1664, 2147483648
    %v1666 = vsel %vm1545, %v1665, %v1664
    %v1667 = vsub.s32 4, %v1643
    %v1668 = vsel %vm1545, %v1667, %v1643
    %v1669 = vsel %vm1544, %v1527, %v1666
    %v1670 = vsel %vm1544, 0, %v1668
    %v1671 = vmul.f32 %v1669, %v1669
    %v1672 = vmul.f32 %v1671, -0.001358992
    %v1673 = vadd.f32 %v1672, 0.041655596
    %v1674 = vmul.f32 %v1671, %v1673
    %v1675 = vadd.f32 %v1674, -0.4999988
    %v1676 = vmul.f32 %v1671, %v1675
    %v1677 = vadd.f32 1.0, %v1676
    %v1678 = vmul.f32 %v1669, %v1669
    %v1679 = vmul.f32 %v1678, -0.00019511016
    %v1680 = vadd.f32 %v1679, 0.008332121
    %v1681 = vmul.f32 %v1678, %v1680
    %v1682 = vadd.f32 %v1681, -0.16666654
    %v1683 = vmul.f32 %v1678, %v1682
    %v1684 = vadd.f32 %v1683, 1.0
    %v1685 = vmul.f32 %v1684, %v1669
    %vm1686 = vweird.f32 %v1527
    %v1687 = vadd.s32 %v1670, 3
    %v1688 = vand.u32 %v1687, 3
    %vm1689 = vcmp.lt.s32.totalorder %v1688, 2
    %vm1690 = vcmp.eq.s32.totalorder %v1688, 0
    %v1691 = vxor.u32 %v1685, 2147483648
    %v1692 = vsel %vm1690, %v1677, %v1691
    %vm1693 = vcmp.eq.s32.totalorder %v1688, 2
    %v1694 = vxor.u32 %v1677, 2147483648
    %v1695 = vsel %vm1693, %v1694, %v1685
    %v1696 = vsel %vm1689, %v1692, %v1695
    %v1697 = vsel %vm1686, nan, %v1696
    %v1698 = vmul.f32 %v1697, %v1542
    %v1699 = vand.u32 2147483647, %v1527
    %vm1700 = vcmp.le.f32.partialorder %v1699, 0.7853982
    %vm1701 = vcmp.lt.s32.totalorder %v1527, 0
    %v1702 = vand.u32 %v1527, 2139095040
    %v1703 = vshrl.u32 %v1702, 23
    %v1704 = vsub.s32 %v1703, 127
    %v1705 = vand.u32 2147483647, %v1527
    %v1706 = vand.u32 %v1705, 8388607
    %v1707 = vor.u32 %v1706, 8388608
    %v1708 = vsub.s32 0, %v1707
    %v1709 = vadd.s32 %v1704, 1
    %vm1710 = vcmp.gt.s32.totalorder %v1709, 0
    %v1711 = vsel %vm1710, %v1709, 0
    %v1712 = vshrl.u32 %v1711, 5
    %v1713 = vand.u32 %v1711, 31
    %v1714 = vsub.s32 32, %v1713
    %v1715 = vshrl.u32 683565275, %v1714
    %v1716 = vshll.u32 683565275, %v1713
    %v1717 = vshrl.u32 2475754826, %v1714
    %v1718 = vor.u32 %v1716, %v1717
    %v1719 = vshll.u32 2475754826, %v1713
    %v1720 = vshrl.u32 2131351028, %v1714
    %v1721 = vor.u32 %v1719, %v1720
    %v1722 = vshll.u32 2131351028, %v1713
    %v1723 = vshrl.u32 2102212464, %v1714
    %v1724 = vor.u32 %v1722, %v1723
    %v1725 = vshll.u32 2102212464, %v1713
    %v1726 = vshrl.u32 920167782, %v1714
    %v1727 = vor.u32 %v1725, %v1726
    %v1728 = vshll.u32 920167782, %v1713
    %v1729 = vshrl.u32 1326507024, %v1714
    %v1730 = vor.u32 %v1728, %v1729
    %vm1731 = vcmp.lt.s32.totalorder %v1712, 1
    %vm1732 = vcmp.lt.s32.totalorder %v1712, 2
    %vm1733 = vcmp.lt.s32.totalorder %v1712, 3
    %vm1734 = vcmp.lt.s32.totalorder %v1712, 4
    %v1735 = vsel %vm1731, %v1715, %v1718
    %v1736 = vsel %vm1734, %v1724, 2102212464
    %v1737 = vsel %vm1733, %v1721, %v1736
    %v1738 = vsel %vm1732, %v1735, %v1737
    %v1739 = vsel %vm1731, %v1718, %v1721
    %v1740 = vsel %vm1734, %v1727, 920167782
    %v1741 = vsel %vm1733, %v1724, %v1740
    %v1742 = vsel %vm1732, %v1739, %v1741
    %v1743 = vsel %vm1731, %v1721, %v1724
    %v1744 = vsel %vm1734, %v1730, 1326507024
    %v1745 = vsel %vm1733, %v1727, %v1744
    %v1746 = vsel %vm1732, %v1743, %v1745
    %v1747 = vshll.u32 %v1707, 8
    %v1748 = vand.u32 %v1747, 65535
    %v1749 = vshrl.u32 %v1747, 16
    %v1750 = vand.u32 %v1746, 65535
    %v1751 = vshrl.u32 %v1746, 16
    %v1752 = vmul.u32 %v1748, %v1750
    %v1753 = vmul.u32 %v1748, %v1751
    %v1754 = vmul.u32 %v1749, %v1750
    %v1755 = vmul.u32 %v1749, %v1751
    %v1756 = vshll.u32 %v1753, 16
    %v1757 = vshrl.u32 %v1753, 16
    %v1758 = vshll.u32 %v1754, 16
    %v1759 = vshrl.u32 %v1754, 16
    %vm1760 = vc.u32 %v1752, %v1756
    %v1761 = vsel %vm1760, 1, 0
    %v1762 = vadd.s32 %v1752, %v1756
    %v1763 = vadd.s32 %v1755, %v1761
    %vm1764 = vc.u32 %v1762, %v1758
    %v1765 = vsel %vm1764, 1, 0
    %v1766 = vadd.s32 %v1762, %v1758
    %v1767 = vadd.s32 %v1763, %v1765
    %v1768 = vadd.s32 %v1767, %v1757
    %v1769 = vadd.s32 %v1768, %v1759
    %v1770 = vand.u32 %v1747, 65535
    %v1771 = vshrl.u32 %v1747, 16
    %v1772 = vand.u32 %v1742, 65535
    %v1773 = vshrl.u32 %v1742, 16
    %v1774 = vmul.u32 %v1770, %v1772
    %v1775 = vmul.u32 %v1770, %v1773
    %v1776 = vmul.u32 %v1771, %v1772
    %v1777 = vmul.u32 %v1771, %v1773
    %v1778 = vshll.u32 %v1775, 16
    %v1779 = vshrl.u32 %v1775, 16
    %v1780 = vshll.u32 %v1776, 16
    %v1781 = vshrl.u32 %v1776, 16
    %vm1782 = vc.u32 %v1774, %v1778
    %v1783 = vsel %vm1782, 1, 0
    %v1784 = vadd.s32 %v1774, %v1778
    %v1785 = vadd.s32 %v1777, %v1783
    %vm1786 = vc.u32 %v1784, %v1780
    %v1787 = vsel %vm1786, 1, 0
    %v1788 = vadd.s32 %v1784, %v1780
    %v1789 = vadd.s32 %v1785, %v1787
    %v1790 = vadd.s32 %v1789, %v1779
    %v1791 = vadd.s32 %v1790, %v1781
    %v1792 = vmul.u32 %v1747, %v1738
    %v1793 = vadd.s32 %v1769, %v1788
    %vm1794 = vc.u32 %v1769, %v1788
    %v1795 = vadd.s32 %v1791, 1
    %v1796 = vsel %vm1794, %v1795, %v1791
    %v1797 = vadd.s32 %v1792, %v1796
    %v1798 = vadd.s32 %v1797, 536870912
    %v1799 = vshrl.u32 %v1798, 30
    %v1800 = vshll.u32 %v1799, 30
    %v1801 = vsub.s32 %v1797, %v1800
    %vm1802 = vcmp.lt.s32.totalorder %v1801, 0
    %v1803 = vsub.s32 0, %v1801
    %v1804 = vsel %vm1802, %v1803, %v1801
    %v1805 = vclz %v1804
    %v1806 = vsub.s32 %v1805, 2
    %vm1807 = vcmp.gt.s32.totalorder 0, %v1806
    %v1808 = vsel %vm1807, 0, %v1806
    %v1809 = vsub.s32 32, %v1808
    %v1810 = vshll.u32 %v1801, %v1808
    %v1811 = vshrl.u32 %v1793, %v1809
    %v1812 = vor.u32 %v1810, %v1811
    %v1813 = vsub.s32 4294967266, %v1808
    %v1814 = vadd.s32 %v1813, 127
    %v1815 = vshll.u32 %v1814, 23
    %v1816 = vor.u32 4788187, %v1815
    %v1817 = vand.u32 2147483647, %v1816
    %v1819 = vcvt.s32.f32 %v1812
    %v1820 = vmul.f32 %v1819, %v1817
    %v1821 = vxor.u32 %v1820, 2147483648
    %v1822 = vsel %vm1701, %v1821, %v1820
    %v1823 = vsub.s32 4, %v1799
    %v1824 = vsel %vm1701, %v1823, %v1799
    %v1825 = vsel %vm1700, %v1527, %v1822
    %v1826 = vsel %vm1700, 0, %v1824
    %v1827 = vmul.f32 %v1825, %v1825
    %v1828 = vmul.f32 %v1827, -0.001358992
    %v1829 = vadd.f32 %v1828, 0.041655596
    %v1830 = vmul.f32 %v1827, %v1829
    %v1831 = vadd.f32 %v1830, -0.4999988
    %v1832 = vmul.f32 %v1827, %v1831
    %v1833 = vadd.f32 1.0, %v1832
    %v1834 = vmul.f32 %v1825, %v1825
    %v1835 = vmul.f32 %v1834, -0.00019511016
    %v1836 = vadd.f32 %v1835, 0.008332121
    %v1837 = vmul.f32 %v1834, %v1836
    %v1838 = vadd.f32 %v1837, -0.16666654
    %v1839 = vmul.f32 %v1834, %v1838
    %v1840 = vadd.f32 %v1839, 1.0
    %v1841 = vmul.f32 %v1840, %v1825
    %vm1842 = vweird.f32 %v1527
    %v1843 = vand.u32 %v1826, 3
    %vm1844 = vcmp.lt.s32.totalorder %v1843, 2
    %vm1845 = vcmp.eq.s32.totalorder %v1843, 0
    %v1846 = vxor.u32 %v1841, 2147483648
    %v1847 = vsel %vm1845, %v1833, %v1846
    %vm1848 = vcmp.eq.s32.totalorder %v1843, 2
    %v1849 = vxor.u32 %v1833, 2147483648
    %v1850 = vsel %vm1848, %v1849, %v1841
    %v1851 = vsel %vm1844, %v1847, %v1850
    %v1852 = vsel %vm1842, nan, %v1851
    %v1853 = vsub.f32 %v1698, %v1852
    %v1854 = vmul.f32 %v1853, %v1542
    %v1855 = vmul.f32 %v1542, 3.0
    %v1856 = vmul.f32 %v1855, %v1854
    %v1857 = vsub.f32 %v1856, %v1698
    %v1858 = vmul.f32 %v1542, 5.0
    %v1859 = vmul.f32 %v1858, %v1857
    %v1860 = vsub.f32 %v1859, %v1854
    %v1861 = vmul.f32 %v1542, 7.0
    %v1862 = vmul.f32 %v1861, %v1860
    %v1863 = vsub.f32 %v1862, %v1857
    %1865 = vset.pattern.permute.xlu0 4
    %1866 = vperm.xlu0 %1865, %v1521
    %v1867 = vpop.permute.xlu0 %1866
    %v1869 = vmul.f32 %v1867, %v1863
    %v1870 = vmul.f32 %v445, %v1869
    %v1872 = vperm.slane %v1519, 0
    %v1874 = vmul.f32 %v1870, %v1872
    %1875 = vst [vmem:[#allocation10 + $0x18] sm:$0x3f] %v1874
    %v1876 = vmul.f32 %v255, 7.3678703
    %v1877 = vadd.f32 %v1876, 0.0
    %v1878 = vmul.f32 %v1877, %v255
    %v1879 = vadd.f32 %v1878, -8.1865225
    %v1880 = vmul.f32 %v1879, %v255
    %v1881 = vadd.f32 %v1880, 0.0
    %v1882 = vmul.f32 %v1881, %v255
    %v1883 = vadd.f32 %v1882, 1.7542548
    %v1884 = vmul.f32 %v1883, %v255
    %v1885 = vadd.f32 %v1884, 0.0
    %v1886 = vld [vmem:[#allocation7] sm:$0x3f]
    %v1887 = vld [vmem:[#allocation8] sm:$0x3f]
    %1889 = vset.pattern.permute.xlu0 5
    %1890 = vperm.xlu0 %1889, %v1886
    %v1891 = vpop.permute.xlu0 %1890
    %v1893 = vmul.f32 %v1891, %v264
    %v1894 = vrcp.pop %v1893
    %v1895 = vmul.f32 %v1893, %v1894
    %v1896 = vsub.f32 1.0, %v1895
    %v1897 = vmul.f32 %v1894, %v1896
    %v1898 = vadd.f32 %v1894, %v1897
    %vm1899 = vweird.f32 %v1893
    %vm1900 = vweird.f32 %v1894
    %vm1901 = vmor %vm1899, %vm1900
    %v1902 = vsel %vm1901, %v1894, %v1898
    %v1903 = vand.u32 2147483647, %v1893
    %vm1904 = vcmp.eq.f32.partialorder %v1903, 8.507059e+37
    %v1905 = vand.u32 %v1893, 2147483648
    %v1906 = vor.u32 1.1754944e-38, %v1905
    %v1907 = vsel %vm1904, %v1906, %v1902
    %v1908 = vmul.f32 1.0, %v1907
    %v1909 = vand.u32 2147483647, %v1893
    %vm1910 = vcmp.le.f32.partialorder %v1909, 0.7853982
    %vm1911 = vcmp.lt.s32.totalorder %v1893, 0
    %v1912 = vand.u32 %v1893, 2139095040
    %v1913 = vshrl.u32 %v1912, 23
    %v1914 = vsub.s32 %v1913, 127
    %v1915 = vand.u32 2147483647, %v1893
    %v1916 = vand.u32 %v1915, 8388607
    %v1917 = vor.u32 %v1916, 8388608
    %v1918 = vsub.s32 0, %v1917
    %v1919 = vadd.s32 %v1914, 1
    %vm1920 = vcmp.gt.s32.totalorder %v1919, 0
    %v1921 = vsel %vm1920, %v1919, 0
    %v1922 = vshrl.u32 %v1921, 5
    %v1923 = vand.u32 %v1921, 31
    %v1924 = vsub.s32 32, %v1923
    %v1925 = vshrl.u32 683565275, %v1924
    %v1926 = vshll.u32 683565275, %v1923
    %v1927 = vshrl.u32 2475754826, %v1924
    %v1928 = vor.u32 %v1926, %v1927
    %v1929 = vshll.u32 2475754826, %v1923
    %v1930 = vshrl.u32 2131351028, %v1924
    %v1931 = vor.u32 %v1929, %v1930
    %v1932 = vshll.u32 2131351028, %v1923
    %v1933 = vshrl.u32 2102212464, %v1924
    %v1934 = vor.u32 %v1932, %v1933
    %v1935 = vshll.u32 2102212464, %v1923
    %v1936 = vshrl.u32 920167782, %v1924
    %v1937 = vor.u32 %v1935, %v1936
    %v1938 = vshll.u32 920167782, %v1923
    %v1939 = vshrl.u32 1326507024, %v1924
    %v1940 = vor.u32 %v1938, %v1939
    %vm1941 = vcmp.lt.s32.totalorder %v1922, 1
    %vm1942 = vcmp.lt.s32.totalorder %v1922, 2
    %vm1943 = vcmp.lt.s32.totalorder %v1922, 3
    %vm1944 = vcmp.lt.s32.totalorder %v1922, 4
    %v1945 = vsel %vm1941, %v1925, %v1928
    %v1946 = vsel %vm1944, %v1934, 2102212464
    %v1947 = vsel %vm1943, %v1931, %v1946
    %v1948 = vsel %vm1942, %v1945, %v1947
    %v1949 = vsel %vm1941, %v1928, %v1931
    %v1950 = vsel %vm1944, %v1937, 920167782
    %v1951 = vsel %vm1943, %v1934, %v1950
    %v1952 = vsel %vm1942, %v1949, %v1951
    %v1953 = vsel %vm1941, %v1931, %v1934
    %v1954 = vsel %vm1944, %v1940, 1326507024
    %v1955 = vsel %vm1943, %v1937, %v1954
    %v1956 = vsel %vm1942, %v1953, %v1955
    %v1957 = vshll.u32 %v1917, 8
    %v1958 = vand.u32 %v1957, 65535
    %v1959 = vshrl.u32 %v1957, 16
    %v1960 = vand.u32 %v1956, 65535
    %v1961 = vshrl.u32 %v1956, 16
    %v1962 = vmul.u32 %v1958, %v1960
    %v1963 = vmul.u32 %v1958, %v1961
    %v1964 = vmul.u32 %v1959, %v1960
    %v1965 = vmul.u32 %v1959, %v1961
    %v1966 = vshll.u32 %v1963, 16
    %v1967 = vshrl.u32 %v1963, 16
    %v1968 = vshll.u32 %v1964, 16
    %v1969 = vshrl.u32 %v1964, 16
    %vm1970 = vc.u32 %v1962, %v1966
    %v1971 = vsel %vm1970, 1, 0
    %v1972 = vadd.s32 %v1962, %v1966
    %v1973 = vadd.s32 %v1965, %v1971
    %vm1974 = vc.u32 %v1972, %v1968
    %v1975 = vsel %vm1974, 1, 0
    %v1976 = vadd.s32 %v1972, %v1968
    %v1977 = vadd.s32 %v1973, %v1975
    %v1978 = vadd.s32 %v1977, %v1967
    %v1979 = vadd.s32 %v1978, %v1969
    %v1980 = vand.u32 %v1957, 65535
    %v1981 = vshrl.u32 %v1957, 16
    %v1982 = vand.u32 %v1952, 65535
    %v1983 = vshrl.u32 %v1952, 16
    %v1984 = vmul.u32 %v1980, %v1982
    %v1985 = vmul.u32 %v1980, %v1983
    %v1986 = vmul.u32 %v1981, %v1982
    %v1987 = vmul.u32 %v1981, %v1983
    %v1988 = vshll.u32 %v1985, 16
    %v1989 = vshrl.u32 %v1985, 16
    %v1990 = vshll.u32 %v1986, 16
    %v1991 = vshrl.u32 %v1986, 16
    %vm1992 = vc.u32 %v1984, %v1988
    %v1993 = vsel %vm1992, 1, 0
    %v1994 = vadd.s32 %v1984, %v1988
    %v1995 = vadd.s32 %v1987, %v1993
    %vm1996 = vc.u32 %v1994, %v1990
    %v1997 = vsel %vm1996, 1, 0
    %v1998 = vadd.s32 %v1994, %v1990
    %v1999 = vadd.s32 %v1995, %v1997
    %v2000 = vadd.s32 %v1999, %v1989
    %v2001 = vadd.s32 %v2000, %v1991
    %v2002 = vmul.u32 %v1957, %v1948
    %v2003 = vadd.s32 %v1979, %v1998
    %vm2004 = vc.u32 %v1979, %v1998
    %v2005 = vadd.s32 %v2001, 1
    %v2006 = vsel %vm2004, %v2005, %v2001
    %v2007 = vadd.s32 %v2002, %v2006
    %v2008 = vadd.s32 %v2007, 536870912
    %v2009 = vshrl.u32 %v2008, 30
    %v2010 = vshll.u32 %v2009, 30
    %v2011 = vsub.s32 %v2007, %v2010
    %vm2012 = vcmp.lt.s32.totalorder %v2011, 0
    %v2013 = vsub.s32 0, %v2011
    %v2014 = vsel %vm2012, %v2013, %v2011
    %v2015 = vclz %v2014
    %v2016 = vsub.s32 %v2015, 2
    %vm2017 = vcmp.gt.s32.totalorder 0, %v2016
    %v2018 = vsel %vm2017, 0, %v2016
    %v2019 = vsub.s32 32, %v2018
    %v2020 = vshll.u32 %v2011, %v2018
    %v2021 = vshrl.u32 %v2003, %v2019
    %v2022 = vor.u32 %v2020, %v2021
    %v2023 = vsub.s32 4294967266, %v2018
    %v2024 = vadd.s32 %v2023, 127
    %v2025 = vshll.u32 %v2024, 23
    %v2026 = vor.u32 4788187, %v2025
    %v2027 = vand.u32 2147483647, %v2026
    %v2029 = vcvt.s32.f32 %v2022
    %v2030 = vmul.f32 %v2029, %v2027
    %v2031 = vxor.u32 %v2030, 2147483648
    %v2032 = vsel %vm1911, %v2031, %v2030
    %v2033 = vsub.s32 4, %v2009
    %v2034 = vsel %vm1911, %v2033, %v2009
    %v2035 = vsel %vm1910, %v1893, %v2032
    %v2036 = vsel %vm1910, 0, %v2034
    %v2037 = vmul.f32 %v2035, %v2035
    %v2038 = vmul.f32 %v2037, -0.001358992
    %v2039 = vadd.f32 %v2038, 0.041655596
    %v2040 = vmul.f32 %v2037, %v2039
    %v2041 = vadd.f32 %v2040, -0.4999988
    %v2042 = vmul.f32 %v2037, %v2041
    %v2043 = vadd.f32 1.0, %v2042
    %v2044 = vmul.f32 %v2035, %v2035
    %v2045 = vmul.f32 %v2044, -0.00019511016
    %v2046 = vadd.f32 %v2045, 0.008332121
    %v2047 = vmul.f32 %v2044, %v2046
    %v2048 = vadd.f32 %v2047, -0.16666654
    %v2049 = vmul.f32 %v2044, %v2048
    %v2050 = vadd.f32 %v2049, 1.0
    %v2051 = vmul.f32 %v2050, %v2035
    %vm2052 = vweird.f32 %v1893
    %v2053 = vadd.s32 %v2036, 3
    %v2054 = vand.u32 %v2053, 3
    %vm2055 = vcmp.lt.s32.totalorder %v2054, 2
    %vm2056 = vcmp.eq.s32.totalorder %v2054, 0
    %v2057 = vxor.u32 %v2051, 2147483648
    %v2058 = vsel %vm2056, %v2043, %v2057
    %vm2059 = vcmp.eq.s32.totalorder %v2054, 2
    %v2060 = vxor.u32 %v2043, 2147483648
    %v2061 = vsel %vm2059, %v2060, %v2051
    %v2062 = vsel %vm2055, %v2058, %v2061
    %v2063 = vsel %vm2052, nan, %v2062
    %v2064 = vmul.f32 %v2063, %v1908
    %v2065 = vand.u32 2147483647, %v1893
    %vm2066 = vcmp.le.f32.partialorder %v2065, 0.7853982
    %vm2067 = vcmp.lt.s32.totalorder %v1893, 0
    %v2068 = vand.u32 %v1893, 2139095040
    %v2069 = vshrl.u32 %v2068, 23
    %v2070 = vsub.s32 %v2069, 127
    %v2071 = vand.u32 2147483647, %v1893
    %v2072 = vand.u32 %v2071, 8388607
    %v2073 = vor.u32 %v2072, 8388608
    %v2074 = vsub.s32 0, %v2073
    %v2075 = vadd.s32 %v2070, 1
    %vm2076 = vcmp.gt.s32.totalorder %v2075, 0
    %v2077 = vsel %vm2076, %v2075, 0
    %v2078 = vshrl.u32 %v2077, 5
    %v2079 = vand.u32 %v2077, 31
    %v2080 = vsub.s32 32, %v2079
    %v2081 = vshrl.u32 683565275, %v2080
    %v2082 = vshll.u32 683565275, %v2079
    %v2083 = vshrl.u32 2475754826, %v2080
    %v2084 = vor.u32 %v2082, %v2083
    %v2085 = vshll.u32 2475754826, %v2079
    %v2086 = vshrl.u32 2131351028, %v2080
    %v2087 = vor.u32 %v2085, %v2086
    %v2088 = vshll.u32 2131351028, %v2079
    %v2089 = vshrl.u32 2102212464, %v2080
    %v2090 = vor.u32 %v2088, %v2089
    %v2091 = vshll.u32 2102212464, %v2079
    %v2092 = vshrl.u32 920167782, %v2080
    %v2093 = vor.u32 %v2091, %v2092
    %v2094 = vshll.u32 920167782, %v2079
    %v2095 = vshrl.u32 1326507024, %v2080
    %v2096 = vor.u32 %v2094, %v2095
    %vm2097 = vcmp.lt.s32.totalorder %v2078, 1
    %vm2098 = vcmp.lt.s32.totalorder %v2078, 2
    %vm2099 = vcmp.lt.s32.totalorder %v2078, 3
    %vm2100 = vcmp.lt.s32.totalorder %v2078, 4
    %v2101 = vsel %vm2097, %v2081, %v2084
    %v2102 = vsel %vm2100, %v2090, 2102212464
    %v2103 = vsel %vm2099, %v2087, %v2102
    %v2104 = vsel %vm2098, %v2101, %v2103
    %v2105 = vsel %vm2097, %v2084, %v2087
    %v2106 = vsel %vm2100, %v2093, 920167782
    %v2107 = vsel %vm2099, %v2090, %v2106
    %v2108 = vsel %vm2098, %v2105, %v2107
    %v2109 = vsel %vm2097, %v2087, %v2090
    %v2110 = vsel %vm2100, %v2096, 1326507024
    %v2111 = vsel %vm2099, %v2093, %v2110
    %v2112 = vsel %vm2098, %v2109, %v2111
    %v2113 = vshll.u32 %v2073, 8
    %v2114 = vand.u32 %v2113, 65535
    %v2115 = vshrl.u32 %v2113, 16
    %v2116 = vand.u32 %v2112, 65535
    %v2117 = vshrl.u32 %v2112, 16
    %v2118 = vmul.u32 %v2114, %v2116
    %v2119 = vmul.u32 %v2114, %v2117
    %v2120 = vmul.u32 %v2115, %v2116
    %v2121 = vmul.u32 %v2115, %v2117
    %v2122 = vshll.u32 %v2119, 16
    %v2123 = vshrl.u32 %v2119, 16
    %v2124 = vshll.u32 %v2120, 16
    %v2125 = vshrl.u32 %v2120, 16
    %vm2126 = vc.u32 %v2118, %v2122
    %v2127 = vsel %vm2126, 1, 0
    %v2128 = vadd.s32 %v2118, %v2122
    %v2129 = vadd.s32 %v2121, %v2127
    %vm2130 = vc.u32 %v2128, %v2124
    %v2131 = vsel %vm2130, 1, 0
    %v2132 = vadd.s32 %v2128, %v2124
    %v2133 = vadd.s32 %v2129, %v2131
    %v2134 = vadd.s32 %v2133, %v2123
    %v2135 = vadd.s32 %v2134, %v2125
    %v2136 = vand.u32 %v2113, 65535
    %v2137 = vshrl.u32 %v2113, 16
    %v2138 = vand.u32 %v2108, 65535
    %v2139 = vshrl.u32 %v2108, 16
    %v2140 = vmul.u32 %v2136, %v2138
    %v2141 = vmul.u32 %v2136, %v2139
    %v2142 = vmul.u32 %v2137, %v2138
    %v2143 = vmul.u32 %v2137, %v2139
    %v2144 = vshll.u32 %v2141, 16
    %v2145 = vshrl.u32 %v2141, 16
    %v2146 = vshll.u32 %v2142, 16
    %v2147 = vshrl.u32 %v2142, 16
    %vm2148 = vc.u32 %v2140, %v2144
    %v2149 = vsel %vm2148, 1, 0
    %v2150 = vadd.s32 %v2140, %v2144
    %v2151 = vadd.s32 %v2143, %v2149
    %vm2152 = vc.u32 %v2150, %v2146
    %v2153 = vsel %vm2152, 1, 0
    %v2154 = vadd.s32 %v2150, %v2146
    %v2155 = vadd.s32 %v2151, %v2153
    %v2156 = vadd.s32 %v2155, %v2145
    %v2157 = vadd.s32 %v2156, %v2147
    %v2158 = vmul.u32 %v2113, %v2104
    %v2159 = vadd.s32 %v2135, %v2154
    %vm2160 = vc.u32 %v2135, %v2154
    %v2161 = vadd.s32 %v2157, 1
    %v2162 = vsel %vm2160, %v2161, %v2157
    %v2163 = vadd.s32 %v2158, %v2162
    %v2164 = vadd.s32 %v2163, 536870912
    %v2165 = vshrl.u32 %v2164, 30
    %v2166 = vshll.u32 %v2165, 30
    %v2167 = vsub.s32 %v2163, %v2166
    %vm2168 = vcmp.lt.s32.totalorder %v2167, 0
    %v2169 = vsub.s32 0, %v2167
    %v2170 = vsel %vm2168, %v2169, %v2167
    %v2171 = vclz %v2170
    %v2172 = vsub.s32 %v2171, 2
    %vm2173 = vcmp.gt.s32.totalorder 0, %v2172
    %v2174 = vsel %vm2173, 0, %v2172
    %v2175 = vsub.s32 32, %v2174
    %v2176 = vshll.u32 %v2167, %v2174
    %v2177 = vshrl.u32 %v2159, %v2175
    %v2178 = vor.u32 %v2176, %v2177
    %v2179 = vsub.s32 4294967266, %v2174
    %v2180 = vadd.s32 %v2179, 127
    %v2181 = vshll.u32 %v2180, 23
    %v2182 = vor.u32 4788187, %v2181
    %v2183 = vand.u32 2147483647, %v2182
    %v2185 = vcvt.s32.f32 %v2178
    %v2186 = vmul.f32 %v2185, %v2183
    %v2187 = vxor.u32 %v2186, 2147483648
    %v2188 = vsel %vm2067, %v2187, %v2186
    %v2189 = vsub.s32 4, %v2165
    %v2190 = vsel %vm2067, %v2189, %v2165
    %v2191 = vsel %vm2066, %v1893, %v2188
    %v2192 = vsel %vm2066, 0, %v2190
    %v2193 = vmul.f32 %v2191, %v2191
    %v2194 = vmul.f32 %v2193, -0.001358992
    %v2195 = vadd.f32 %v2194, 0.041655596
    %v2196 = vmul.f32 %v2193, %v2195
    %v2197 = vadd.f32 %v2196, -0.4999988
    %v2198 = vmul.f32 %v2193, %v2197
    %v2199 = vadd.f32 1.0, %v2198
    %v2200 = vmul.f32 %v2191, %v2191
    %v2201 = vmul.f32 %v2200, -0.00019511016
    %v2202 = vadd.f32 %v2201, 0.008332121
    %v2203 = vmul.f32 %v2200, %v2202
    %v2204 = vadd.f32 %v2203, -0.16666654
    %v2205 = vmul.f32 %v2200, %v2204
    %v2206 = vadd.f32 %v2205, 1.0
    %v2207 = vmul.f32 %v2206, %v2191
    %vm2208 = vweird.f32 %v1893
    %v2209 = vand.u32 %v2192, 3
    %vm2210 = vcmp.lt.s32.totalorder %v2209, 2
    %vm2211 = vcmp.eq.s32.totalorder %v2209, 0
    %v2212 = vxor.u32 %v2207, 2147483648
    %v2213 = vsel %vm2211, %v2199, %v2212
    %vm2214 = vcmp.eq.s32.totalorder %v2209, 2
    %v2215 = vxor.u32 %v2199, 2147483648
    %v2216 = vsel %vm2214, %v2215, %v2207
    %v2217 = vsel %vm2210, %v2213, %v2216
    %v2218 = vsel %vm2208, nan, %v2217
    %v2219 = vsub.f32 %v2064, %v2218
    %v2220 = vmul.f32 %v2219, %v1908
    %v2221 = vmul.f32 %v1908, 3.0
    %v2222 = vmul.f32 %v2221, %v2220
    %v2223 = vsub.f32 %v2222, %v2064
    %v2224 = vmul.f32 %v1908, 5.0
    %v2225 = vmul.f32 %v2224, %v2223
    %v2226 = vsub.f32 %v2225, %v2220
    %v2227 = vmul.f32 %v1908, 7.0
    %v2228 = vmul.f32 %v2227, %v2226
    %v2229 = vsub.f32 %v2228, %v2223
    %v2230 = vmul.f32 %v1908, 9.0
    %v2231 = vmul.f32 %v2230, %v2229
    %v2232 = vsub.f32 %v2231, %v2226
    %2234 = vset.pattern.permute.xlu0 5
    %2235 = vperm.xlu0 %2234, %v1887
    %v2236 = vpop.permute.xlu0 %2235
    %v2238 = vmul.f32 %v2236, %v2232
    %v2239 = vmul.f32 %v445, %v2238
    %v2241 = vperm.slane %v1885, 0
    %v2243 = vmul.f32 %v2239, %v2241
    %2244 = vst [vmem:[#allocation10 + $0x1e] sm:$0x3f] %v2243
    %v2245 = vmul.f32 %v255, 14.684485
    %v2246 = vadd.f32 %v2245, 0.0
    %v2247 = vmul.f32 %v2246, %v255
    %v2248 = vadd.f32 %v2247, -20.0243
    %v2249 = vmul.f32 %v2248, %v255
    %v2250 = vadd.f32 %v2249, 0.0
    %v2251 = vmul.f32 %v2250, %v255
    %v2252 = vadd.f32 %v2251, 6.674766
    %v2253 = vmul.f32 %v2252, %v255
    %v2254 = vadd.f32 %v2253, 0.0
    %v2255 = vmul.f32 %v2254, %v255
    %v2256 = vadd.f32 %v2255, -0.317846
    %v2257 = vld [vmem:[#allocation7] sm:$0x3f]
    %v2258 = vld [vmem:[#allocation8] sm:$0x3f]
    %2260 = vset.pattern.permute.xlu0 6
    %2261 = vperm.xlu0 %2260, %v2257
    %v2262 = vpop.permute.xlu0 %2261
    %v2264 = vmul.f32 %v2262, %v264
    %v2265 = vrcp.pop %v2264
    %v2266 = vmul.f32 %v2264, %v2265
    %v2267 = vsub.f32 1.0, %v2266
    %v2268 = vmul.f32 %v2265, %v2267
    %v2269 = vadd.f32 %v2265, %v2268
    %vm2270 = vweird.f32 %v2264
    %vm2271 = vweird.f32 %v2265
    %vm2272 = vmor %vm2270, %vm2271
    %v2273 = vsel %vm2272, %v2265, %v2269
    %v2274 = vand.u32 2147483647, %v2264
    %vm2275 = vcmp.eq.f32.partialorder %v2274, 8.507059e+37
    %v2276 = vand.u32 %v2264, 2147483648
    %v2277 = vor.u32 1.1754944e-38, %v2276
    %v2278 = vsel %vm2275, %v2277, %v2273
    %v2279 = vmul.f32 1.0, %v2278
    %v2280 = vand.u32 2147483647, %v2264
    %vm2281 = vcmp.le.f32.partialorder %v2280, 0.7853982
    %vm2282 = vcmp.lt.s32.totalorder %v2264, 0
    %v2283 = vand.u32 %v2264, 2139095040
    %v2284 = vshrl.u32 %v2283, 23
    %v2285 = vsub.s32 %v2284, 127
    %v2286 = vand.u32 2147483647, %v2264
    %v2287 = vand.u32 %v2286, 8388607
    %v2288 = vor.u32 %v2287, 8388608
    %v2289 = vsub.s32 0, %v2288
    %v2290 = vadd.s32 %v2285, 1
    %vm2291 = vcmp.gt.s32.totalorder %v2290, 0
    %v2292 = vsel %vm2291, %v2290, 0
    %v2293 = vshrl.u32 %v2292, 5
    %v2294 = vand.u32 %v2292, 31
    %v2295 = vsub.s32 32, %v2294
    %v2296 = vshrl.u32 683565275, %v2295
    %v2297 = vshll.u32 683565275, %v2294
    %v2298 = vshrl.u32 2475754826, %v2295
    %v2299 = vor.u32 %v2297, %v2298
    %v2300 = vshll.u32 2475754826, %v2294
    %v2301 = vshrl.u32 2131351028, %v2295
    %v2302 = vor.u32 %v2300, %v2301
    %v2303 = vshll.u32 2131351028, %v2294
    %v2304 = vshrl.u32 2102212464, %v2295
    %v2305 = vor.u32 %v2303, %v2304
    %v2306 = vshll.u32 2102212464, %v2294
    %v2307 = vshrl.u32 920167782, %v2295
    %v2308 = vor.u32 %v2306, %v2307
    %v2309 = vshll.u32 920167782, %v2294
    %v2310 = vshrl.u32 1326507024, %v2295
    %v2311 = vor.u32 %v2309, %v2310
    %vm2312 = vcmp.lt.s32.totalorder %v2293, 1
    %vm2313 = vcmp.lt.s32.totalorder %v2293, 2
    %vm2314 = vcmp.lt.s32.totalorder %v2293, 3
    %vm2315 = vcmp.lt.s32.totalorder %v2293, 4
    %v2316 = vsel %vm2312, %v2296, %v2299
    %v2317 = vsel %vm2315, %v2305, 2102212464
    %v2318 = vsel %vm2314, %v2302, %v2317
    %v2319 = vsel %vm2313, %v2316, %v2318
    %v2320 = vsel %vm2312, %v2299, %v2302
    %v2321 = vsel %vm2315, %v2308, 920167782
    %v2322 = vsel %vm2314, %v2305, %v2321
    %v2323 = vsel %vm2313, %v2320, %v2322
    %v2324 = vsel %vm2312, %v2302, %v2305
    %v2325 = vsel %vm2315, %v2311, 1326507024
    %v2326 = vsel %vm2314, %v2308, %v2325
    %v2327 = vsel %vm2313, %v2324, %v2326
    %v2328 = vshll.u32 %v2288, 8
    %v2329 = vand.u32 %v2328, 65535
    %v2330 = vshrl.u32 %v2328, 16
    %v2331 = vand.u32 %v2327, 65535
    %v2332 = vshrl.u32 %v2327, 16
    %v2333 = vmul.u32 %v2329, %v2331
    %v2334 = vmul.u32 %v2329, %v2332
    %v2335 = vmul.u32 %v2330, %v2331
    %v2336 = vmul.u32 %v2330, %v2332
    %v2337 = vshll.u32 %v2334, 16
    %v2338 = vshrl.u32 %v2334, 16
    %v2339 = vshll.u32 %v2335, 16
    %v2340 = vshrl.u32 %v2335, 16
    %vm2341 = vc.u32 %v2333, %v2337
    %v2342 = vsel %vm2341, 1, 0
    %v2343 = vadd.s32 %v2333, %v2337
    %v2344 = vadd.s32 %v2336, %v2342
    %vm2345 = vc.u32 %v2343, %v2339
    %v2346 = vsel %vm2345, 1, 0
    %v2347 = vadd.s32 %v2343, %v2339
    %v2348 = vadd.s32 %v2344, %v2346
    %v2349 = vadd.s32 %v2348, %v2338
    %v2350 = vadd.s32 %v2349, %v2340
    %v2351 = vand.u32 %v2328, 65535
    %v2352 = vshrl.u32 %v2328, 16
    %v2353 = vand.u32 %v2323, 65535
    %v2354 = vshrl.u32 %v2323, 16
    %v2355 = vmul.u32 %v2351, %v2353
    %v2356 = vmul.u32 %v2351, %v2354
    %v2357 = vmul.u32 %v2352, %v2353
    %v2358 = vmul.u32 %v2352, %v2354
    %v2359 = vshll.u32 %v2356, 16
    %v2360 = vshrl.u32 %v2356, 16
    %v2361 = vshll.u32 %v2357, 16
    %v2362 = vshrl.u32 %v2357, 16
    %vm2363 = vc.u32 %v2355, %v2359
    %v2364 = vsel %vm2363, 1, 0
    %v2365 = vadd.s32 %v2355, %v2359
    %v2366 = vadd.s32 %v2358, %v2364
    %vm2367 = vc.u32 %v2365, %v2361
    %v2368 = vsel %vm2367, 1, 0
    %v2369 = vadd.s32 %v2365, %v2361
    %v2370 = vadd.s32 %v2366, %v2368
    %v2371 = vadd.s32 %v2370, %v2360
    %v2372 = vadd.s32 %v2371, %v2362
    %v2373 = vmul.u32 %v2328, %v2319
    %v2374 = vadd.s32 %v2350, %v2369
    %vm2375 = vc.u32 %v2350, %v2369
    %v2376 = vadd.s32 %v2372, 1
    %v2377 = vsel %vm2375, %v2376, %v2372
    %v2378 = vadd.s32 %v2373, %v2377
    %v2379 = vadd.s32 %v2378, 536870912
    %v2380 = vshrl.u32 %v2379, 30
    %v2381 = vshll.u32 %v2380, 30
    %v2382 = vsub.s32 %v2378, %v2381
    %vm2383 = vcmp.lt.s32.totalorder %v2382, 0
    %v2384 = vsub.s32 0, %v2382
    %v2385 = vsel %vm2383, %v2384, %v2382
    %v2386 = vclz %v2385
    %v2387 = vsub.s32 %v2386, 2
    %vm2388 = vcmp.gt.s32.totalorder 0, %v2387
    %v2389 = vsel %vm2388, 0, %v2387
    %v2390 = vsub.s32 32, %v2389
    %v2391 = vshll.u32 %v2382, %v2389
    %v2392 = vshrl.u32 %v2374, %v2390
    %v2393 = vor.u32 %v2391, %v2392
    %v2394 = vsub.s32 4294967266, %v2389
    %v2395 = vadd.s32 %v2394, 127
    %v2396 = vshll.u32 %v2395, 23
    %v2397 = vor.u32 4788187, %v2396
    %v2398 = vand.u32 2147483647, %v2397
    %v2400 = vcvt.s32.f32 %v2393
    %v2401 = vmul.f32 %v2400, %v2398
    %v2402 = vxor.u32 %v2401, 2147483648
    %v2403 = vsel %vm2282, %v2402, %v2401
    %v2404 = vsub.s32 4, %v2380
    %v2405 = vsel %vm2282, %v2404, %v2380
    %v2406 = vsel %vm2281, %v2264, %v2403
    %v2407 = vsel %vm2281, 0, %v2405
    %v2408 = vmul.f32 %v2406, %v2406
    %v2409 = vmul.f32 %v2408, -0.001358992
    %v2410 = vadd.f32 %v2409, 0.041655596
    %v2411 = vmul.f32 %v2408, %v2410
    %v2412 = vadd.f32 %v2411, -0.4999988
    %v2413 = vmul.f32 %v2408, %v2412
    %v2414 = vadd.f32 1.0, %v2413
    %v2415 = vmul.f32 %v2406, %v2406
    %v2416 = vmul.f32 %v2415, -0.00019511016
    %v2417 = vadd.f32 %v2416, 0.008332121
    %v2418 = vmul.f32 %v2415, %v2417
    %v2419 = vadd.f32 %v2418, -0.16666654
    %v2420 = vmul.f32 %v2415, %v2419
    %v2421 = vadd.f32 %v2420, 1.0
    %v2422 = vmul.f32 %v2421, %v2406
    %vm2423 = vweird.f32 %v2264
    %v2424 = vadd.s32 %v2407, 3
    %v2425 = vand.u32 %v2424, 3
    %vm2426 = vcmp.lt.s32.totalorder %v2425, 2
    %vm2427 = vcmp.eq.s32.totalorder %v2425, 0
    %v2428 = vxor.u32 %v2422, 2147483648
    %v2429 = vsel %vm2427, %v2414, %v2428
    %vm2430 = vcmp.eq.s32.totalorder %v2425, 2
    %v2431 = vxor.u32 %v2414, 2147483648
    %v2432 = vsel %vm2430, %v2431, %v2422
    %v2433 = vsel %vm2426, %v2429, %v2432
    %v2434 = vsel %vm2423, nan, %v2433
    %v2435 = vmul.f32 %v2434, %v2279
    %v2436 = vand.u32 2147483647, %v2264
    %vm2437 = vcmp.le.f32.partialorder %v2436, 0.7853982
    %vm2438 = vcmp.lt.s32.totalorder %v2264, 0
    %v2439 = vand.u32 %v2264, 2139095040
    %v2440 = vshrl.u32 %v2439, 23
    %v2441 = vsub.s32 %v2440, 127
    %v2442 = vand.u32 2147483647, %v2264
    %v2443 = vand.u32 %v2442, 8388607
    %v2444 = vor.u32 %v2443, 8388608
    %v2445 = vsub.s32 0, %v2444
    %v2446 = vadd.s32 %v2441, 1
    %vm2447 = vcmp.gt.s32.totalorder %v2446, 0
    %v2448 = vsel %vm2447, %v2446, 0
    %v2449 = vshrl.u32 %v2448, 5
    %v2450 = vand.u32 %v2448, 31
    %v2451 = vsub.s32 32, %v2450
    %v2452 = vshrl.u32 683565275, %v2451
    %v2453 = vshll.u32 683565275, %v2450
    %v2454 = vshrl.u32 2475754826, %v2451
    %v2455 = vor.u32 %v2453, %v2454
    %v2456 = vshll.u32 2475754826, %v2450
    %v2457 = vshrl.u32 2131351028, %v2451
    %v2458 = vor.u32 %v2456, %v2457
    %v2459 = vshll.u32 2131351028, %v2450
    %v2460 = vshrl.u32 2102212464, %v2451
    %v2461 = vor.u32 %v2459, %v2460
    %v2462 = vshll.u32 2102212464, %v2450
    %v2463 = vshrl.u32 920167782, %v2451
    %v2464 = vor.u32 %v2462, %v2463
    %v2465 = vshll.u32 920167782, %v2450
    %v2466 = vshrl.u32 1326507024, %v2451
    %v2467 = vor.u32 %v2465, %v2466
    %vm2468 = vcmp.lt.s32.totalorder %v2449, 1
    %vm2469 = vcmp.lt.s32.totalorder %v2449, 2
    %vm2470 = vcmp.lt.s32.totalorder %v2449, 3
    %vm2471 = vcmp.lt.s32.totalorder %v2449, 4
    %v2472 = vsel %vm2468, %v2452, %v2455
    %v2473 = vsel %vm2471, %v2461, 2102212464
    %v2474 = vsel %vm2470, %v2458, %v2473
    %v2475 = vsel %vm2469, %v2472, %v2474
    %v2476 = vsel %vm2468, %v2455, %v2458
    %v2477 = vsel %vm2471, %v2464, 920167782
    %v2478 = vsel %vm2470, %v2461, %v2477
    %v2479 = vsel %vm2469, %v2476, %v2478
    %v2480 = vsel %vm2468, %v2458, %v2461
    %v2481 = vsel %vm2471, %v2467, 1326507024
    %v2482 = vsel %vm2470, %v2464, %v2481
    %v2483 = vsel %vm2469, %v2480, %v2482
    %v2484 = vshll.u32 %v2444, 8
    %v2485 = vand.u32 %v2484, 65535
    %v2486 = vshrl.u32 %v2484, 16
    %v2487 = vand.u32 %v2483, 65535
    %v2488 = vshrl.u32 %v2483, 16
    %v2489 = vmul.u32 %v2485, %v2487
    %v2490 = vmul.u32 %v2485, %v2488
    %v2491 = vmul.u32 %v2486, %v2487
    %v2492 = vmul.u32 %v2486, %v2488
    %v2493 = vshll.u32 %v2490, 16
    %v2494 = vshrl.u32 %v2490, 16
    %v2495 = vshll.u32 %v2491, 16
    %v2496 = vshrl.u32 %v2491, 16
    %vm2497 = vc.u32 %v2489, %v2493
    %v2498 = vsel %vm2497, 1, 0
    %v2499 = vadd.s32 %v2489, %v2493
    %v2500 = vadd.s32 %v2492, %v2498
    %vm2501 = vc.u32 %v2499, %v2495
    %v2502 = vsel %vm2501, 1, 0
    %v2503 = vadd.s32 %v2499, %v2495
    %v2504 = vadd.s32 %v2500, %v2502
    %v2505 = vadd.s32 %v2504, %v2494
    %v2506 = vadd.s32 %v2505, %v2496
    %v2507 = vand.u32 %v2484, 65535
    %v2508 = vshrl.u32 %v2484, 16
    %v2509 = vand.u32 %v2479, 65535
    %v2510 = vshrl.u32 %v2479, 16
    %v2511 = vmul.u32 %v2507, %v2509
    %v2512 = vmul.u32 %v2507, %v2510
    %v2513 = vmul.u32 %v2508, %v2509
    %v2514 = vmul.u32 %v2508, %v2510
    %v2515 = vshll.u32 %v2512, 16
    %v2516 = vshrl.u32 %v2512, 16
    %v2517 = vshll.u32 %v2513, 16
    %v2518 = vshrl.u32 %v2513, 16
    %vm2519 = vc.u32 %v2511, %v2515
    %v2520 = vsel %vm2519, 1, 0
    %v2521 = vadd.s32 %v2511, %v2515
    %v2522 = vadd.s32 %v2514, %v2520
    %vm2523 = vc.u32 %v2521, %v2517
    %v2524 = vsel %vm2523, 1, 0
    %v2525 = vadd.s32 %v2521, %v2517
    %v2526 = vadd.s32 %v2522, %v2524
    %v2527 = vadd.s32 %v2526, %v2516
    %v2528 = vadd.s32 %v2527, %v2518
    %v2529 = vmul.u32 %v2484, %v2475
    %v2530 = vadd.s32 %v2506, %v2525
    %vm2531 = vc.u32 %v2506, %v2525
    %v2532 = vadd.s32 %v2528, 1
    %v2533 = vsel %vm2531, %v2532, %v2528
    %v2534 = vadd.s32 %v2529, %v2533
    %v2535 = vadd.s32 %v2534, 536870912
    %v2536 = vshrl.u32 %v2535, 30
    %v2537 = vshll.u32 %v2536, 30
    %v2538 = vsub.s32 %v2534, %v2537
    %vm2539 = vcmp.lt.s32.totalorder %v2538, 0
    %v2540 = vsub.s32 0, %v2538
    %v2541 = vsel %vm2539, %v2540, %v2538
    %v2542 = vclz %v2541
    %v2543 = vsub.s32 %v2542, 2
    %vm2544 = vcmp.gt.s32.totalorder 0, %v2543
    %v2545 = vsel %vm2544, 0, %v2543
    %v2546 = vsub.s32 32, %v2545
    %v2547 = vshll.u32 %v2538, %v2545
    %v2548 = vshrl.u32 %v2530, %v2546
    %v2549 = vor.u32 %v2547, %v2548
    %v2550 = vsub.s32 4294967266, %v2545
    %v2551 = vadd.s32 %v2550, 127
    %v2552 = vshll.u32 %v2551, 23
    %v2553 = vor.u32 4788187, %v2552
    %v2554 = vand.u32 2147483647, %v2553
    %v2556 = vcvt.s32.f32 %v2549
    %v2557 = vmul.f32 %v2556, %v2554
    %v2558 = vxor.u32 %v2557, 2147483648
    %v2559 = vsel %vm2438, %v2558, %v2557
    %v2560 = vsub.s32 4, %v2536
    %v2561 = vsel %vm2438, %v2560, %v2536
    %v2562 = vsel %vm2437, %v2264, %v2559
    %v2563 = vsel %vm2437, 0, %v2561
    %v2564 = vmul.f32 %v2562, %v2562
    %v2565 = vmul.f32 %v2564, -0.001358992
    %v2566 = vadd.f32 %v2565, 0.041655596
    %v2567 = vmul.f32 %v2564, %v2566
    %v2568 = vadd.f32 %v2567, -0.4999988
    %v2569 = vmul.f32 %v2564, %v2568
    %v2570 = vadd.f32 1.0, %v2569
    %v2571 = vmul.f32 %v2562, %v2562
    %v2572 = vmul.f32 %v2571, -0.00019511016
    %v2573 = vadd.f32 %v2572, 0.008332121
    %v2574 = vmul.f32 %v2571, %v2573
    %v2575 = vadd.f32 %v2574, -0.16666654
    %v2576 = vmul.f32 %v2571, %v2575
    %v2577 = vadd.f32 %v2576, 1.0
    %v2578 = vmul.f32 %v2577, %v2562
    %vm2579 = vweird.f32 %v2264
    %v2580 = vand.u32 %v2563, 3
    %vm2581 = vcmp.lt.s32.totalorder %v2580, 2
    %vm2582 = vcmp.eq.s32.totalorder %v2580, 0
    %v2583 = vxor.u32 %v2578, 2147483648
    %v2584 = vsel %vm2582, %v2570, %v2583
    %vm2585 = vcmp.eq.s32.totalorder %v2580, 2
    %v2586 = vxor.u32 %v2570, 2147483648
    %v2587 = vsel %vm2585, %v2586, %v2578
    %v2588 = vsel %vm2581, %v2584, %v2587
    %v2589 = vsel %vm2579, nan, %v2588
    %v2590 = vsub.f32 %v2435, %v2589
    %v2591 = vmul.f32 %v2590, %v2279
    %v2592 = vmul.f32 %v2279, 3.0
    %v2593 = vmul.f32 %v2592, %v2591
    %v2594 = vsub.f32 %v2593, %v2435
    %v2595 = vmul.f32 %v2279, 5.0
    %v2596 = vmul.f32 %v2595, %v2594
    %v2597 = vsub.f32 %v2596, %v2591
    %v2598 = vmul.f32 %v2279, 7.0
    %v2599 = vmul.f32 %v2598, %v2597
    %v2600 = vsub.f32 %v2599, %v2594
    %v2601 = vmul.f32 %v2279, 9.0
    %v2602 = vmul.f32 %v2601, %v2600
    %v2603 = vsub.f32 %v2602, %v2597
    %v2604 = vmul.f32 %v2279, 11.0
    %v2605 = vmul.f32 %v2604, %v2603
    %v2606 = vsub.f32 %v2605, %v2600
    %2608 = vset.pattern.permute.xlu0 6
    %2609 = vperm.xlu0 %2608, %v2258
    %v2610 = vpop.permute.xlu0 %2609
    %v2612 = vmul.f32 %v2610, %v2606
    %v2613 = vmul.f32 %v445, %v2612
    %v2615 = vperm.slane %v2256, 0
    %v2617 = vmul.f32 %v2613, %v2615
    %2618 = vst [vmem:[#allocation10 + $0x24] sm:$0x3f] %v2617
    // Predicated region
    $region34: #{tpu_custom_call.1} parent=1 // pred_check
      _
    $region35: #{tpu_custom_call.1} parent=1 // pred_check_branch
      %2620 = sbr.rel (0) target = $region37
    $region36: #{tpu_custom_call.1} parent=1 // pred_region
      %2622 = vsyncadd [#allocation4], 0
      %s2623 = sshll.u32 [#allocation10], 4
      %s2624 = int_to_ptr.vmem [resolvable:$true] %s2623
      %s2625 = sshll.u32 %s4, 4
      %s2626 = int_to_ptr.hbm [resolvable:$true] %s2625
      %2631 = dma.vmem_to_hbm [thread:$0]  %s2624, 768, %s2626, [#allocation4], 128, 128, 8
    $region37: #{tpu_custom_call.1} parent=1 // pred_fallthru
      _
    // Predicated region
    $region38: #{tpu_custom_call.1} parent=1 // pred_check
      _
    $region39: #{tpu_custom_call.1} parent=1 // pred_check_branch
      %2633 = sbr.rel (0) target = $region41
    $region40: #{tpu_custom_call.1} parent=1 // pred_region
      %2635 = dma.done [#allocation4], 768
    $region41: #{tpu_custom_call.1} parent=1 // pred_fallthru
      _
    %2636 = vsyncpa [#allocation3], 1
    %2637 = vsyncpa [#allocation6], 1
    %2638 = vsyncpa [#allocation9], 1
    %2639 = vsyncpa [#allocation4], 1

</llo_original>
